<compile_context>
chip_gen: v7x
topology: tpu7x:2x2x1
jax: 0.10.0
libtpu: 0.0.40
codegen_flags: <defaults>
</compile_context>

<pallas_src>
import jax
import jax.numpy as jnp
from jax import lax
from jax.experimental import pallas as pl
from jax.experimental.pallas import tpu as pltpu


# ---------------------------------------------------------------------------
# Helpers
# ---------------------------------------------------------------------------
def _pick_tile(n, target, align):
    """Largest divisor of n that is <= target and a multiple of `align`;
    falls back to n itself (a full-extent block is always legal)."""
    if n <= target:
        return n
    for t in range(target, 0, -1):
        if n % t == 0 and t % align == 0:
            return t
    return n


def _device_kind():
    try:
        return jax.devices()[0].device_kind.lower()
    except Exception:  # defensive (e.g. interpret / odd backends)
        return ""


def _pad_lanes(a, axis):
    """Pad `axis` up to a multiple of 128 when it is large and ragged so GEMM
    tiles stay lane-dense (avoids full-width fallback blocks for e.g. V=50257)."""
    n = a.shape[axis]
    if n <= 128 or n % 128 == 0:
        return a, n
    n_pad = ((n + 127) // 128) * 128
    pad = [(0, 0)] * a.ndim
    pad[axis] = (0, n_pad - n)
    return jnp.pad(a, pad), n_pad


def _gemm_cost(m, k, n, a_bytes, w_bytes, o_bytes):
    return pl.CostEstimate(
        flops=2 * m * k * n,
        transcendentals=0,
        bytes_accessed=m * k * a_bytes + k * n * w_bytes + m * n * o_bytes,
    )


# ---------------------------------------------------------------------------
# Phase 1: xhb[s, b, :] = x[b, s, :] @ W_xh + b_h   (time-major output, bf16)
# ---------------------------------------------------------------------------
def _input_proj_kernel(x_ref, wxh_ref, bh_ref, xhb_ref):
    # x_ref: (B, ts, D) f32   wxh_ref: (D, tn) bf16   bh_ref: (1, tn) f32
    # xhb_ref: (ts, B, tn) bf16  -- written time-major (no HBM transpose).
    ts = x_ref.shape[1]
    for t in range(ts):                                # static unroll
        xhb_ref[t] = (
            jnp.dot(x_ref[:, t, :].astype(wxh_ref.dtype), wxh_ref[...],
                    preferred_element_type=jnp.float32)
            + bh_ref[...]
        ).astype(xhb_ref.dtype)


def _input_projection(x, wxh, bh, *, out_dtype, vmem_limit):
    B, S, D = x.shape
    H = wxh.shape[1]
    ts = _pick_tile(S, 32, 8)       # sublane axis of the x block
    tn = _pick_tile(H, 512, 128)    # lane tile of W_xh / xhb
    return pl.pallas_call(
        _input_proj_kernel,
        out_shape=jax.ShapeDtypeStruct((S, B, H), out_dtype),
        grid_spec=pltpu.PrefetchScalarGridSpec(
            num_scalar_prefetch=0,
            # H tiles outermost: the W_xh tile has a constant index map along the
            # inner (time) axis, so each weight tile is fetched from HBM once.
            grid=(H // tn, S // ts),
            in_specs=[
                pl.BlockSpec((B, ts, D), lambda j, s: (0, s, 0)),
                pl.BlockSpec((D, tn), lambda j, s: (0, j)),
                pl.BlockSpec((1, tn), lambda j, s: (0, j)),
            ],
            out_specs=pl.BlockSpec((ts, B, tn), lambda j, s: (s, 0, j)),
        ),
        compiler_params=pltpu.CompilerParams(
            dimension_semantics=("parallel", "parallel"),
            vmem_limit_bytes=vmem_limit),
        cost_estimate=_gemm_cost(B * S, D, H, x.dtype.itemsize,
                                 wxh.dtype.itemsize, 2),
    )(x, wxh, bh)


# ---------------------------------------------------------------------------
# Phase 2: serial recurrence  h_t = tanh(xhb_t + h_{t-1} @ W_hh)
# ---------------------------------------------------------------------------
def _rnn_recurrence_kernel(xhb_ref, whh_hbm, h_out_ref, whh_vmem, h_carry_ref):
    tb = pl.program_id(1)

    @pl.when(tb == 0)
    def _():
        # Stage W_hh once per sequence into a SINGLE-buffered VMEM scratch
        # (half the residency of a double-buffered pipeline slot) and reset the
        # hidden state (init_state = zeros).
        pltpu.sync_copy(whh_hbm, whh_vmem)
        h_carry_ref[...] = jnp.zeros_like(h_carry_ref)

    t_chunk = xhb_ref.shape[0]

    def step(t, h):
        # xhb already holds x_t @ W_xh + b_h (bf16); add + tanh stay in f32.
        pre = xhb_ref[t].astype(jnp.float32) + jnp.dot(
            h.astype(whh_vmem.dtype), whh_vmem[...],
            preferred_element_type=jnp.float32)
        h_new = jnp.tanh(pre)
        h_out_ref[t] = h_new.astype(h_out_ref.dtype)
        return h_new

    h_final = lax.fori_loop(0, t_chunk, step, h_carry_ref[...], unroll=True)
    h_carry_ref[...] = h_final


def _num_batch_blocks(B, H, is_v7x):
    """Split the batch only when useful: across v7x's two TensorCores, or to keep
    the register-carried hidden state (b_chunk, H) f32 under ~96 KiB.  On
    v5e/v6e (one TensorCore) an unnecessary split just under-fills the MXU."""
    def fits(nb):
        return (B // nb) * H * 4 <= 96 * 1024
    candidates = [nb for nb in range(1, B + 1)
                  if B % nb == 0 and (nb == 1 or (B // nb) % 8 == 0)]
    nb = next((c for c in candidates if fits(c)), candidates[-1])
    if is_v7x and nb == 1 and B % 16 == 0:
        nb = 2      # one batch block per TensorCore (megacore)
    return nb


# ---------------------------------------------------------------------------
# Phase 3: logits[b, s, :] = h[s, b, :] @ W_ho + b_o   (output directly (B,S,V))
# ---------------------------------------------------------------------------
def _vocab_head_kernel(h_ref, who_ref, bo_ref, out_ref):
    # h_ref: (ts, B, H) bf16 time-major   who_ref: (H, tv) bf16   bo_ref: (1, tv)
    # out_ref: (B, ts, tv) f32  -- logits produced directly in (B, S, V) layout.
    ts = h_ref.shape[0]
    for t in range(ts):                                # static unroll
        out_ref[:, t, :] = (
            jnp.dot(h_ref[t], who_ref[...], preferred_element_type=jnp.float32)
            + bo_ref[...]
        ).astype(out_ref.dtype)


def _vocab_head(h_sbh, who, bo, *, vmem_limit):
    S, B, H = h_sbh.shape
    V = who.shape[1]
    ts = _pick_tile(S, 32, 8)
    tv = _pick_tile(V, 512, 128)
    return pl.pallas_call(
        _vocab_head_kernel,
        out_shape=jax.ShapeDtypeStruct((B, S, V), jnp.float32),
        grid_spec=pltpu.PrefetchScalarGridSpec(
            num_scalar_prefetch=0,
            # Vocab tiles OUTERMOST: W_ho (the large operand) has a constant
            # index map along the inner time axis, so each W_ho tile is read
            # from HBM exactly once instead of S/ts times.
            grid=(V // tv, S // ts),
            in_specs=[
                pl.BlockSpec((ts, B, H), lambda j, s: (s, 0, 0)),
                pl.BlockSpec((H, tv), lambda j, s: (0, j)),
                pl.BlockSpec((1, tv), lambda j, s: (0, j)),
            ],
            out_specs=pl.BlockSpec((B, ts, tv), lambda j, s: (0, s, j)),
        ),
        compiler_params=pltpu.CompilerParams(
            dimension_semantics=("parallel", "parallel"),
            vmem_limit_bytes=vmem_limit),
        cost_estimate=_gemm_cost(B * S, H, V, h_sbh.dtype.itemsize,
                                 who.dtype.itemsize, 4),
    )(h_sbh, who, bo)


# ---------------------------------------------------------------------------
# Full forward pass
# ---------------------------------------------------------------------------
def rnn_language_model_forward(x, params, *, matmul_dtype=jnp.bfloat16):
    """x: (B, S, D) float32. Returns logits (B, S, V) float32."""
    wxh, whh, bh, who, bo = (params["wxh"], params["whh"], params["bh"],
                             params["who"], params["bo"])
    B, S, D = x.shape
    H = whh.shape[0]
    V = who.shape[1]
    cast = lambda a: a.astype(matmul_dtype)

    kind = _device_kind()
    is_v7x = "v7" in kind
    # Per-generation VMEM budgets (v7x: 64 MiB physical; v5e/v6e: 128 MiB).
    gemm_vmem = (48 if is_v7x else 64) * 1024 * 1024
    rnn_vmem = 32 * 1024 * 1024

    # ---- Phase 1: input projection + hidden bias, time-major (S, B, H), bf16. ----
    xhb = _input_projection(x, cast(wxh), bh,
                            out_dtype=matmul_dtype, vmem_limit=gemm_vmem)

    # ---- Phase 2: serial recurrence (only h_{t-1} @ W_hh + tanh on hot path). ----
    t_chunk = _pick_tile(S, 16 if is_v7x else 32, 1)   # time steps per grid step
    n_batch_blocks = _num_batch_blocks(B, H, is_v7x)
    b_chunk = B // n_batch_blocks
    # NOTE: for real configs pick H as a multiple of 128 (lane-dense stores);
    # it is left full-extent here since the recurrence needs the whole H anyway.

    h_sbh = pl.pallas_call(
        _rnn_recurrence_kernel,
        out_shape=jax.ShapeDtypeStruct((S, B, H), matmul_dtype),
        grid_spec=pltpu.PrefetchScalarGridSpec(
            num_scalar_prefetch=0,
            grid=(n_batch_blocks, S // t_chunk),
            in_specs=[
                pl.BlockSpec((t_chunk, b_chunk, H), lambda b, t: (t, b, 0)),
                # W_hh stays in HBM; the kernel DMAs it once into a single
                # VMEM scratch (no double-buffered pipeline residency).
                pl.BlockSpec(memory_space=pl.ANY),
            ],
            out_specs=pl.BlockSpec((t_chunk, b_chunk, H), lambda b, t: (t, b, 0)),
            scratch_shapes=[
                pltpu.VMEM((H, H), matmul_dtype),        # resident W_hh
                pltpu.VMEM((b_chunk, H), jnp.float32),   # h carried across chunks
            ],
        ),
        compiler_params=pltpu.CompilerParams(
            dimension_semantics=("parallel", "arbitrary"),
            vmem_limit_bytes=rnn_vmem),
    )(xhb, cast(whh))

    # ---- Phase 3: vocab head; reads time-major h, writes logits in (B, S, V). ----
    who_p, v_pad = _pad_lanes(cast(who), axis=1)   # lane-dense tiles for ragged V
    bo_p, _ = _pad_lanes(bo, axis=1)
    logits = _vocab_head(h_sbh, who_p, bo_p, vmem_limit=gemm_vmem)
    if v_pad != V:
        logits = logits[..., :V]
    return logits


# ---------------------------------------------------------------------------
# Pure-JAX f32 reference (lax.scan over time) mirroring the PyTorch forward.
# ---------------------------------------------------------------------------
def _reference_forward(x, params):
    wxh, whh, bh, who, bo = (params["wxh"], params["whh"], params["bh"],
                             params["who"], params["bo"])
    B = x.shape[0]
    H = whh.shape[0]

    def step(h, x_t):
        h = jnp.tanh(x_t @ wxh + h @ whh + bh[0])
        return h, h @ who + bo[0]

    h0 = jnp.zeros((B, H), jnp.float32)
    _, outs = lax.scan(step, h0, jnp.transpose(x, (1, 0, 2)))
    return jnp.transpose(outs, (1, 0, 2))


def init_params(key, inputs_dim, hidden_dim, vocab_size):
    """Deterministic synthetic parameters (shapes implied by the module __init__)."""
    k = jax.random.split(key, 5)
    scale = 0.1
    return {
        "wxh": scale * jax.random.normal(k[0], (inputs_dim, hidden_dim), jnp.float32),
        "whh": scale * jax.random.normal(k[1], (hidden_dim, hidden_dim), jnp.float32),
        "bh":  scale * jax.random.normal(k[2], (1, hidden_dim), jnp.float32),
        # nn.Linear(hidden, vocab): weight (V, H), bias (V); stored pre-transposed.
        "who": scale * jax.random.normal(k[3], (hidden_dim, vocab_size), jnp.float32),
        "bo":  scale * jax.random.normal(k[4], (1, vocab_size), jnp.float32),
    }


if __name__ == "__main__":
    B, S, D, H, V = 2, 8, 32, 32, 64

    key = jax.random.PRNGKey(0)
    kx, kp = jax.random.split(key)
    x = jax.random.normal(kx, (B, S, D), jnp.float32)
    params = init_params(kp, D, H, V)

    fwd = jax.jit(rnn_language_model_forward)
    logits = jax.block_until_ready(fwd(x, params))
    ref = jax.block_until_ready(_reference_forward(x, params))

    assert logits.shape == (B, S, V)
    # bf16 matmul inputs (with f32 accumulation) vs the pure-f32 reference.
    max_err = float(jnp.max(jnp.abs(logits - ref)))
    assert jnp.allclose(logits, ref, rtol=2e-2, atol=2e-2), (
        f"mismatch vs reference (max abs err {max_err})")
    print("KERNEL_OK")
</pallas_src>

<mosaic_0001>
module attributes {stable_mosaic.version = 11 : i64} {
  func.func @_input_proj_kernel(%arg0: i32, %arg1: i32, %arg2: memref<2x8x32xf32, #tpu.memory_space<vmem>>, %arg3: memref<32x32xbf16, #tpu.memory_space<vmem>>, %arg4: memref<1x32xf32, #tpu.memory_space<vmem>>, %arg5: memref<8x2x32xbf16, #tpu.memory_space<vmem>>) attributes {dimension_semantics = [#tpu.dimension_semantics<parallel>, #tpu.dimension_semantics<parallel>], iteration_bounds = array<i64: 1, 1>, scalar_prefetch = 0 : i64, scratch_operands = 0 : i64, tpu.core_type = #tpu.core_type<tc>, window_params = [{transform_indices = @transform_0, window_bounds = array<i64: 2, 8, 32>}, {transform_indices = @transform_1, window_bounds = array<i64: 32, 32>}, {transform_indices = @transform_2, window_bounds = array<i64: 1, 32>}, {transform_indices = @transform_3, window_bounds = array<i64: 8, 2, 32>}]} {
    %c0 = arith.constant 0 : index
    %c0_0 = arith.constant 0 : index
    %c0_1 = arith.constant 0 : index
    %0 = vector.load %arg2[%c0, %c0_0, %c0_1] : memref<2x8x32xf32, #tpu.memory_space<vmem>>, vector<2x1x32xf32>
    %1 = vector.shape_cast %0 : vector<2x1x32xf32> to vector<2x32xf32>
    %2 = arith.truncf %1 : vector<2x32xf32> to vector<2x32xbf16>
    %c0_2 = arith.constant 0 : index
    %c0_3 = arith.constant 0 : index
    %3 = vector.load %arg3[%c0_2, %c0_3] : memref<32x32xbf16, #tpu.memory_space<vmem>>, vector<32x32xbf16>
    %cst = arith.constant dense<0.000000e+00> : vector<2x32xf32>
    %4 = tpu.matmul %2, %3, %cst {dimension_numbers = #tpu.dot_dimension_numbers<[1], [0], [0], [1], [0, 0, 1, 1], [], []>} : vector<2x32xbf16>, vector<32x32xbf16>, vector<2x32xf32> -> vector<2x32xf32>
    %c0_4 = arith.constant 0 : index
    %c0_5 = arith.constant 0 : index
    %5 = vector.load %arg4[%c0_4, %c0_5] : memref<1x32xf32, #tpu.memory_space<vmem>>, vector<1x32xf32>
    %6 = vector.broadcast %5 : vector<1x32xf32> to vector<2x32xf32>
    %7 = arith.addf %4, %6 : vector<2x32xf32>
    %8 = arith.truncf %7 : vector<2x32xf32> to vector<2x32xbf16>
    %c0_6 = arith.constant 0 : index
    %c0_7 = arith.constant 0 : index
    %c0_8 = arith.constant 0 : index
    %9 = vector.load %arg5[%c0_6, %c0_7, %c0_8] : memref<8x2x32xbf16, #tpu.memory_space<vmem>>, vector<1x2x32xbf16>
    %10 = vector.shape_cast %9 : vector<1x2x32xbf16> to vector<2x32xbf16>
    %11 = vector.shape_cast %8 : vector<2x32xbf16> to vector<1x2x32xbf16>
    tpu.vector_store %arg5[%c0_6, %c0_7, %c0_8], %11 {strides = array<i32>} : memref<8x2x32xbf16, #tpu.memory_space<vmem>>, vector<1x2x32xbf16>,
    %c0_9 = arith.constant 0 : index
    %c1 = arith.constant 1 : index
    %c0_10 = arith.constant 0 : index
    %12 = vector.load %arg2[%c0_9, %c1, %c0_10] : memref<2x8x32xf32, #tpu.memory_space<vmem>>, vector<2x1x32xf32>
    %13 = vector.shape_cast %12 : vector<2x1x32xf32> to vector<2x32xf32>
    %14 = arith.truncf %13 : vector<2x32xf32> to vector<2x32xbf16>
    %c0_11 = arith.constant 0 : index
    %c0_12 = arith.constant 0 : index
    %15 = vector.load %arg3[%c0_11, %c0_12] : memref<32x32xbf16, #tpu.memory_space<vmem>>, vector<32x32xbf16>
    %cst_13 = arith.constant dense<0.000000e+00> : vector<2x32xf32>
    %16 = tpu.matmul %14, %15, %cst_13 {dimension_numbers = #tpu.dot_dimension_numbers<[1], [0], [0], [1], [0, 0, 1, 1], [], []>} : vector<2x32xbf16>, vector<32x32xbf16>, vector<2x32xf32> -> vector<2x32xf32>
    %c0_14 = arith.constant 0 : index
    %c0_15 = arith.constant 0 : index
    %17 = vector.load %arg4[%c0_14, %c0_15] : memref<1x32xf32, #tpu.memory_space<vmem>>, vector<1x32xf32>
    %18 = vector.broadcast %17 : vector<1x32xf32> to vector<2x32xf32>
    %19 = arith.addf %16, %18 : vector<2x32xf32>
    %20 = arith.truncf %19 : vector<2x32xf32> to vector<2x32xbf16>
    %c1_16 = arith.constant 1 : index
    %c0_17 = arith.constant 0 : index
    %c0_18 = arith.constant 0 : index
    %21 = vector.load %arg5[%c1_16, %c0_17, %c0_18] : memref<8x2x32xbf16, #tpu.memory_space<vmem>>, vector<1x2x32xbf16>
    %22 = vector.shape_cast %21 : vector<1x2x32xbf16> to vector<2x32xbf16>
    %23 = vector.shape_cast %20 : vector<2x32xbf16> to vector<1x2x32xbf16>
    tpu.vector_store %arg5[%c1_16, %c0_17, %c0_18], %23 {strides = array<i32>} : memref<8x2x32xbf16, #tpu.memory_space<vmem>>, vector<1x2x32xbf16>,
    %c0_19 = arith.constant 0 : index
    %c2 = arith.constant 2 : index
    %c0_20 = arith.constant 0 : index
    %24 = vector.load %arg2[%c0_19, %c2, %c0_20] : memref<2x8x32xf32, #tpu.memory_space<vmem>>, vector<2x1x32xf32>
    %25 = vector.shape_cast %24 : vector<2x1x32xf32> to vector<2x32xf32>
    %26 = arith.truncf %25 : vector<2x32xf32> to vector<2x32xbf16>
    %c0_21 = arith.constant 0 : index
    %c0_22 = arith.constant 0 : index
    %27 = vector.load %arg3[%c0_21, %c0_22] : memref<32x32xbf16, #tpu.memory_space<vmem>>, vector<32x32xbf16>
    %cst_23 = arith.constant dense<0.000000e+00> : vector<2x32xf32>
    %28 = tpu.matmul %26, %27, %cst_23 {dimension_numbers = #tpu.dot_dimension_numbers<[1], [0], [0], [1], [0, 0, 1, 1], [], []>} : vector<2x32xbf16>, vector<32x32xbf16>, vector<2x32xf32> -> vector<2x32xf32>
    %c0_24 = arith.constant 0 : index
    %c0_25 = arith.constant 0 : index
    %29 = vector.load %arg4[%c0_24, %c0_25] : memref<1x32xf32, #tpu.memory_space<vmem>>, vector<1x32xf32>
    %30 = vector.broadcast %29 : vector<1x32xf32> to vector<2x32xf32>
    %31 = arith.addf %28, %30 : vector<2x32xf32>
    %32 = arith.truncf %31 : vector<2x32xf32> to vector<2x32xbf16>
    %c2_26 = arith.constant 2 : index
    %c0_27 = arith.constant 0 : index
    %c0_28 = arith.constant 0 : index
    %33 = vector.load %arg5[%c2_26, %c0_27, %c0_28] : memref<8x2x32xbf16, #tpu.memory_space<vmem>>, vector<1x2x32xbf16>
    %34 = vector.shape_cast %33 : vector<1x2x32xbf16> to vector<2x32xbf16>
    %35 = vector.shape_cast %32 : vector<2x32xbf16> to vector<1x2x32xbf16>
    tpu.vector_store %arg5[%c2_26, %c0_27, %c0_28], %35 {strides = array<i32>} : memref<8x2x32xbf16, #tpu.memory_space<vmem>>, vector<1x2x32xbf16>,
    %c0_29 = arith.constant 0 : index
    %c3 = arith.constant 3 : index
    %c0_30 = arith.constant 0 : index
    %36 = vector.load %arg2[%c0_29, %c3, %c0_30] : memref<2x8x32xf32, #tpu.memory_space<vmem>>, vector<2x1x32xf32>
    %37 = vector.shape_cast %36 : vector<2x1x32xf32> to vector<2x32xf32>
    %38 = arith.truncf %37 : vector<2x32xf32> to vector<2x32xbf16>
    %c0_31 = arith.constant 0 : index
    %c0_32 = arith.constant 0 : index
    %39 = vector.load %arg3[%c0_31, %c0_32] : memref<32x32xbf16, #tpu.memory_space<vmem>>, vector<32x32xbf16>
    %cst_33 = arith.constant dense<0.000000e+00> : vector<2x32xf32>
    %40 = tpu.matmul %38, %39, %cst_33 {dimension_numbers = #tpu.dot_dimension_numbers<[1], [0], [0], [1], [0, 0, 1, 1], [], []>} : vector<2x32xbf16>, vector<32x32xbf16>, vector<2x32xf32> -> vector<2x32xf32>
    %c0_34 = arith.constant 0 : index
    %c0_35 = arith.constant 0 : index
    %41 = vector.load %arg4[%c0_34, %c0_35] : memref<1x32xf32, #tpu.memory_space<vmem>>, vector<1x32xf32>
    %42 = vector.broadcast %41 : vector<1x32xf32> to vector<2x32xf32>
    %43 = arith.addf %40, %42 : vector<2x32xf32>
    %44 = arith.truncf %43 : vector<2x32xf32> to vector<2x32xbf16>
    %c3_36 = arith.constant 3 : index
    %c0_37 = arith.constant 0 : index
    %c0_38 = arith.constant 0 : index
    %45 = vector.load %arg5[%c3_36, %c0_37, %c0_38] : memref<8x2x32xbf16, #tpu.memory_space<vmem>>, vector<1x2x32xbf16>
    %46 = vector.shape_cast %45 : vector<1x2x32xbf16> to vector<2x32xbf16>
    %47 = vector.shape_cast %44 : vector<2x32xbf16> to vector<1x2x32xbf16>
    tpu.vector_store %arg5[%c3_36, %c0_37, %c0_38], %47 {strides = array<i32>} : memref<8x2x32xbf16, #tpu.memory_space<vmem>>, vector<1x2x32xbf16>,
    %c0_39 = arith.constant 0 : index
    %c4 = arith.constant 4 : index
    %c0_40 = arith.constant 0 : index
    %48 = vector.load %arg2[%c0_39, %c4, %c0_40] : memref<2x8x32xf32, #tpu.memory_space<vmem>>, vector<2x1x32xf32>
    %49 = vector.shape_cast %48 : vector<2x1x32xf32> to vector<2x32xf32>
    %50 = arith.truncf %49 : vector<2x32xf32> to vector<2x32xbf16>
    %c0_41 = arith.constant 0 : index
    %c0_42 = arith.constant 0 : index
    %51 = vector.load %arg3[%c0_41, %c0_42] : memref<32x32xbf16, #tpu.memory_space<vmem>>, vector<32x32xbf16>
    %cst_43 = arith.constant dense<0.000000e+00> : vector<2x32xf32>
    %52 = tpu.matmul %50, %51, %cst_43 {dimension_numbers = #tpu.dot_dimension_numbers<[1], [0], [0], [1], [0, 0, 1, 1], [], []>} : vector<2x32xbf16>, vector<32x32xbf16>, vector<2x32xf32> -> vector<2x32xf32>
    %c0_44 = arith.constant 0 : index
    %c0_45 = arith.constant 0 : index
    %53 = vector.load %arg4[%c0_44, %c0_45] : memref<1x32xf32, #tpu.memory_space<vmem>>, vector<1x32xf32>
    %54 = vector.broadcast %53 : vector<1x32xf32> to vector<2x32xf32>
    %55 = arith.addf %52, %54 : vector<2x32xf32>
    %56 = arith.truncf %55 : vector<2x32xf32> to vector<2x32xbf16>
    %c4_46 = arith.constant 4 : index
    %c0_47 = arith.constant 0 : index
    %c0_48 = arith.constant 0 : index
    %57 = vector.load %arg5[%c4_46, %c0_47, %c0_48] : memref<8x2x32xbf16, #tpu.memory_space<vmem>>, vector<1x2x32xbf16>
    %58 = vector.shape_cast %57 : vector<1x2x32xbf16> to vector<2x32xbf16>
    %59 = vector.shape_cast %56 : vector<2x32xbf16> to vector<1x2x32xbf16>
    tpu.vector_store %arg5[%c4_46, %c0_47, %c0_48], %59 {strides = array<i32>} : memref<8x2x32xbf16, #tpu.memory_space<vmem>>, vector<1x2x32xbf16>,
    %c0_49 = arith.constant 0 : index
    %c5 = arith.constant 5 : index
    %c0_50 = arith.constant 0 : index
    %60 = vector.load %arg2[%c0_49, %c5, %c0_50] : memref<2x8x32xf32, #tpu.memory_space<vmem>>, vector<2x1x32xf32>
    %61 = vector.shape_cast %60 : vector<2x1x32xf32> to vector<2x32xf32>
    %62 = arith.truncf %61 : vector<2x32xf32> to vector<2x32xbf16>
    %c0_51 = arith.constant 0 : index
    %c0_52 = arith.constant 0 : index
    %63 = vector.load %arg3[%c0_51, %c0_52] : memref<32x32xbf16, #tpu.memory_space<vmem>>, vector<32x32xbf16>
    %cst_53 = arith.constant dense<0.000000e+00> : vector<2x32xf32>
    %64 = tpu.matmul %62, %63, %cst_53 {dimension_numbers = #tpu.dot_dimension_numbers<[1], [0], [0], [1], [0, 0, 1, 1], [], []>} : vector<2x32xbf16>, vector<32x32xbf16>, vector<2x32xf32> -> vector<2x32xf32>
    %c0_54 = arith.constant 0 : index
    %c0_55 = arith.constant 0 : index
    %65 = vector.load %arg4[%c0_54, %c0_55] : memref<1x32xf32, #tpu.memory_space<vmem>>, vector<1x32xf32>
    %66 = vector.broadcast %65 : vector<1x32xf32> to vector<2x32xf32>
    %67 = arith.addf %64, %66 : vector<2x32xf32>
    %68 = arith.truncf %67 : vector<2x32xf32> to vector<2x32xbf16>
    %c5_56 = arith.constant 5 : index
    %c0_57 = arith.constant 0 : index
    %c0_58 = arith.constant 0 : index
    %69 = vector.load %arg5[%c5_56, %c0_57, %c0_58] : memref<8x2x32xbf16, #tpu.memory_space<vmem>>, vector<1x2x32xbf16>
    %70 = vector.shape_cast %69 : vector<1x2x32xbf16> to vector<2x32xbf16>
    %71 = vector.shape_cast %68 : vector<2x32xbf16> to vector<1x2x32xbf16>
    tpu.vector_store %arg5[%c5_56, %c0_57, %c0_58], %71 {strides = array<i32>} : memref<8x2x32xbf16, #tpu.memory_space<vmem>>, vector<1x2x32xbf16>,
    %c0_59 = arith.constant 0 : index
    %c6 = arith.constant 6 : index
    %c0_60 = arith.constant 0 : index
    %72 = vector.load %arg2[%c0_59, %c6, %c0_60] : memref<2x8x32xf32, #tpu.memory_space<vmem>>, vector<2x1x32xf32>
    %73 = vector.shape_cast %72 : vector<2x1x32xf32> to vector<2x32xf32>
    %74 = arith.truncf %73 : vector<2x32xf32> to vector<2x32xbf16>
    %c0_61 = arith.constant 0 : index
    %c0_62 = arith.constant 0 : index
    %75 = vector.load %arg3[%c0_61, %c0_62] : memref<32x32xbf16, #tpu.memory_space<vmem>>, vector<32x32xbf16>
    %cst_63 = arith.constant dense<0.000000e+00> : vector<2x32xf32>
    %76 = tpu.matmul %74, %75, %cst_63 {dimension_numbers = #tpu.dot_dimension_numbers<[1], [0], [0], [1], [0, 0, 1, 1], [], []>} : vector<2x32xbf16>, vector<32x32xbf16>, vector<2x32xf32> -> vector<2x32xf32>
    %c0_64 = arith.constant 0 : index
    %c0_65 = arith.constant 0 : index
    %77 = vector.load %arg4[%c0_64, %c0_65] : memref<1x32xf32, #tpu.memory_space<vmem>>, vector<1x32xf32>
    %78 = vector.broadcast %77 : vector<1x32xf32> to vector<2x32xf32>
    %79 = arith.addf %76, %78 : vector<2x32xf32>
    %80 = arith.truncf %79 : vector<2x32xf32> to vector<2x32xbf16>
    %c6_66 = arith.constant 6 : index
    %c0_67 = arith.constant 0 : index
    %c0_68 = arith.constant 0 : index
    %81 = vector.load %arg5[%c6_66, %c0_67, %c0_68] : memref<8x2x32xbf16, #tpu.memory_space<vmem>>, vector<1x2x32xbf16>
    %82 = vector.shape_cast %81 : vector<1x2x32xbf16> to vector<2x32xbf16>
    %83 = vector.shape_cast %80 : vector<2x32xbf16> to vector<1x2x32xbf16>
    tpu.vector_store %arg5[%c6_66, %c0_67, %c0_68], %83 {strides = array<i32>} : memref<8x2x32xbf16, #tpu.memory_space<vmem>>, vector<1x2x32xbf16>,
    %c0_69 = arith.constant 0 : index
    %c7 = arith.constant 7 : index
    %c0_70 = arith.constant 0 : index
    %84 = vector.load %arg2[%c0_69, %c7, %c0_70] : memref<2x8x32xf32, #tpu.memory_space<vmem>>, vector<2x1x32xf32>
    %85 = vector.shape_cast %84 : vector<2x1x32xf32> to vector<2x32xf32>
    %86 = arith.truncf %85 : vector<2x32xf32> to vector<2x32xbf16>
    %c0_71 = arith.constant 0 : index
    %c0_72 = arith.constant 0 : index
    %87 = vector.load %arg3[%c0_71, %c0_72] : memref<32x32xbf16, #tpu.memory_space<vmem>>, vector<32x32xbf16>
    %cst_73 = arith.constant dense<0.000000e+00> : vector<2x32xf32>
    %88 = tpu.matmul %86, %87, %cst_73 {dimension_numbers = #tpu.dot_dimension_numbers<[1], [0], [0], [1], [0, 0, 1, 1], [], []>} : vector<2x32xbf16>, vector<32x32xbf16>, vector<2x32xf32> -> vector<2x32xf32>
    %c0_74 = arith.constant 0 : index
    %c0_75 = arith.constant 0 : index
    %89 = vector.load %arg4[%c0_74, %c0_75] : memref<1x32xf32, #tpu.memory_space<vmem>>, vector<1x32xf32>
    %90 = vector.broadcast %89 : vector<1x32xf32> to vector<2x32xf32>
    %91 = arith.addf %88, %90 : vector<2x32xf32>
    %92 = arith.truncf %91 : vector<2x32xf32> to vector<2x32xbf16>
    %c7_76 = arith.constant 7 : index
    %c0_77 = arith.constant 0 : index
    %c0_78 = arith.constant 0 : index
    %93 = vector.load %arg5[%c7_76, %c0_77, %c0_78] : memref<8x2x32xbf16, #tpu.memory_space<vmem>>, vector<1x2x32xbf16>
    %94 = vector.shape_cast %93 : vector<1x2x32xbf16> to vector<2x32xbf16>
    %95 = vector.shape_cast %92 : vector<2x32xbf16> to vector<1x2x32xbf16>
    tpu.vector_store %arg5[%c7_76, %c0_77, %c0_78], %95 {strides = array<i32>} : memref<8x2x32xbf16, #tpu.memory_space<vmem>>, vector<1x2x32xbf16>,
    return
  }
  func.func @transform_0(%arg0: i32, %arg1: i32) -> (i32, i32, i32) {
    %c0_i32 = arith.constant 0 : i32
    %c0_i32_0 = arith.constant 0 : i32
    %c0_i32_1 = arith.constant 0 : i32
    return %c0_i32, %arg1, %c0_i32_0 : i32, i32, i32
  }
  func.func @transform_1(%arg0: i32, %arg1: i32) -> (i32, i32) {
    %c0_i32 = arith.constant 0 : i32
    %c0_i32_0 = arith.constant 0 : i32
    return %c0_i32, %arg0 : i32, i32
  }
  func.func @transform_2(%arg0: i32, %arg1: i32) -> (i32, i32) {
    %c0_i32 = arith.constant 0 : i32
    %c0_i32_0 = arith.constant 0 : i32
    return %c0_i32, %arg0 : i32, i32
  }
  func.func @transform_3(%arg0: i32, %arg1: i32) -> (i32, i32, i32) {
    %c0_i32 = arith.constant 0 : i32
    %c0_i32_0 = arith.constant 0 : i32
    return %arg1, %c0_i32, %arg0 : i32, i32, i32
  }
}

module attributes {stable_mosaic.version = 11 : i64} {
  func.func @_rnn_recurrence_kernel(%arg0: i32, %arg1: i32, %arg2: memref<8x2x32xbf16, #tpu.memory_space<vmem>>, %arg3: memref<32x32xbf16, #tpu.memory_space<any>>, %arg4: memref<8x2x32xbf16, #tpu.memory_space<vmem>>, %arg5: memref<32x32xbf16, #tpu.memory_space<vmem>>, %arg6: memref<2x32xf32, #tpu.memory_space<vmem>>) attributes {dimension_semantics = [#tpu.dimension_semantics<parallel>, #tpu.dimension_semantics<arbitrary>], iteration_bounds = array<i64: 1, 1>, scalar_prefetch = 0 : i64, scratch_operands = 2 : i64, tpu.core_type = #tpu.core_type<tc>, window_params = [{transform_indices = @transform_0, window_bounds = array<i64: 8, 2, 32>}, {}, {transform_indices = @transform_2, window_bounds = array<i64: 8, 2, 32>}]} {
    %c0_i32 = arith.constant 0 : i32
    %0 = arith.cmpi eq, %arg1, %c0_i32 : i32
    %1 = arith.extui %0 : i1 to i32
    %c0_i32_0 = arith.constant 0 : i32
    %2 = arith.cmpi ne, %1, %c0_i32_0 : i32
    scf.if %2 {
      "tpu.region"() ({
        %119 = tpu.sem_alloc : memref<!tpu.dma_semaphore, #tpu.memory_space<semaphore_mem>>
        tpu.enqueue_dma source(%arg3 : memref<32x32xbf16, #tpu.memory_space<any>>) target(%arg5 : memref<32x32xbf16, #tpu.memory_space<vmem>>) target_semaphore(%119 : memref<!tpu.dma_semaphore, #tpu.memory_space<semaphore_mem>>)
        tpu.wait_dma2 semaphore(%119 : memref<!tpu.dma_semaphore, #tpu.memory_space<semaphore_mem>>) src(%arg3 : memref<32x32xbf16, #tpu.memory_space<any>>) dst(%arg5 : memref<32x32xbf16, #tpu.memory_space<vmem>>)
        tpu.yield
      }) : () -> ()
      %cst_60 = arith.constant 0.000000e+00 : f32
      %117 = vector.broadcast %cst_60 : f32 to vector<2x32xf32>
      %c0_61 = arith.constant 0 : index
      %c0_62 = arith.constant 0 : index
      %118 = vector.load %arg6[%c0_61, %c0_62] : memref<2x32xf32, #tpu.memory_space<vmem>>, vector<2x32xf32>
      tpu.vector_store %arg6[%c0_61, %c0_62], %117 {strides = array<i32>} : memref<2x32xf32, #tpu.memory_space<vmem>>, vector<2x32xf32>,
    } else {
    }
    %c0 = arith.constant 0 : index
    %c0_1 = arith.constant 0 : index
    %3 = vector.load %arg6[%c0, %c0_1] : memref<2x32xf32, #tpu.memory_space<vmem>>, vector<2x32xf32>
    %c0_i32_2 = arith.constant 0 : i32
    %4 = arith.index_cast %c0_i32_2 : i32 to index
    %c0_3 = arith.constant 0 : index
    %c0_4 = arith.constant 0 : index
    %5 = vector.load %arg2[%4, %c0_3, %c0_4] : memref<8x2x32xbf16, #tpu.memory_space<vmem>>, vector<1x2x32xbf16>
    %6 = vector.shape_cast %5 : vector<1x2x32xbf16> to vector<2x32xbf16>
    %7 = arith.extf %6 : vector<2x32xbf16> to vector<2x32xf32>
    %8 = arith.truncf %3 : vector<2x32xf32> to vector<2x32xbf16>
    %c0_5 = arith.constant 0 : index
    %c0_6 = arith.constant 0 : index
    %9 = vector.load %arg5[%c0_5, %c0_6] : memref<32x32xbf16, #tpu.memory_space<vmem>>, vector<32x32xbf16>
    %cst = arith.constant dense<0.000000e+00> : vector<2x32xf32>
    %10 = tpu.matmul %8, %9, %cst {dimension_numbers = #tpu.dot_dimension_numbers<[1], [0], [0], [1], [0, 0, 1, 1], [], []>} : vector<2x32xbf16>, vector<32x32xbf16>, vector<2x32xf32> -> vector<2x32xf32>
    %11 = arith.addf %7, %10 : vector<2x32xf32>
    %12 = math.tanh %11 : vector<2x32xf32>
    %13 = arith.truncf %12 : vector<2x32xf32> to vector<2x32xbf16>
    %14 = arith.index_cast %c0_i32_2 : i32 to index
    %c0_7 = arith.constant 0 : index
    %c0_8 = arith.constant 0 : index
    %15 = vector.load %arg4[%14, %c0_7, %c0_8] : memref<8x2x32xbf16, #tpu.memory_space<vmem>>, vector<1x2x32xbf16>
    %16 = vector.shape_cast %15 : vector<1x2x32xbf16> to vector<2x32xbf16>
    %17 = vector.shape_cast %13 : vector<2x32xbf16> to vector<1x2x32xbf16>
    tpu.vector_store %arg4[%14, %c0_7, %c0_8], %17 {strides = array<i32>} : memref<8x2x32xbf16, #tpu.memory_space<vmem>>, vector<1x2x32xbf16>,
    %c1_i32 = arith.constant 1 : i32
    %18 = arith.index_cast %c1_i32 : i32 to index
    %c0_9 = arith.constant 0 : index
    %c0_10 = arith.constant 0 : index
    %19 = vector.load %arg2[%18, %c0_9, %c0_10] : memref<8x2x32xbf16, #tpu.memory_space<vmem>>, vector<1x2x32xbf16>
    %20 = vector.shape_cast %19 : vector<1x2x32xbf16> to vector<2x32xbf16>
    %21 = arith.extf %20 : vector<2x32xbf16> to vector<2x32xf32>
    %22 = arith.truncf %12 : vector<2x32xf32> to vector<2x32xbf16>
    %c0_11 = arith.constant 0 : index
    %c0_12 = arith.constant 0 : index
    %23 = vector.load %arg5[%c0_11, %c0_12] : memref<32x32xbf16, #tpu.memory_space<vmem>>, vector<32x32xbf16>
    %cst_13 = arith.constant dense<0.000000e+00> : vector<2x32xf32>
    %24 = tpu.matmul %22, %23, %cst_13 {dimension_numbers = #tpu.dot_dimension_numbers<[1], [0], [0], [1], [0, 0, 1, 1], [], []>} : vector<2x32xbf16>, vector<32x32xbf16>, vector<2x32xf32> -> vector<2x32xf32>
    %25 = arith.addf %21, %24 : vector<2x32xf32>
    %26 = math.tanh %25 : vector<2x32xf32>
    %27 = arith.truncf %26 : vector<2x32xf32> to vector<2x32xbf16>
    %28 = arith.index_cast %c1_i32 : i32 to index
    %c0_14 = arith.constant 0 : index
    %c0_15 = arith.constant 0 : index
    %29 = vector.load %arg4[%28, %c0_14, %c0_15] : memref<8x2x32xbf16, #tpu.memory_space<vmem>>, vector<1x2x32xbf16>
    %30 = vector.shape_cast %29 : vector<1x2x32xbf16> to vector<2x32xbf16>
    %31 = vector.shape_cast %27 : vector<2x32xbf16> to vector<1x2x32xbf16>
    tpu.vector_store %arg4[%28, %c0_14, %c0_15], %31 {strides = array<i32>} : memref<8x2x32xbf16, #tpu.memory_space<vmem>>, vector<1x2x32xbf16>,
    %c2_i32 = arith.constant 2 : i32
    %32 = arith.index_cast %c2_i32 : i32 to index
    %c0_16 = arith.constant 0 : index
    %c0_17 = arith.constant 0 : index
    %33 = vector.load %arg2[%32, %c0_16, %c0_17] : memref<8x2x32xbf16, #tpu.memory_space<vmem>>, vector<1x2x32xbf16>
    %34 = vector.shape_cast %33 : vector<1x2x32xbf16> to vector<2x32xbf16>
    %35 = arith.extf %34 : vector<2x32xbf16> to vector<2x32xf32>
    %36 = arith.truncf %26 : vector<2x32xf32> to vector<2x32xbf16>
    %c0_18 = arith.constant 0 : index
    %c0_19 = arith.constant 0 : index
    %37 = vector.load %arg5[%c0_18, %c0_19] : memref<32x32xbf16, #tpu.memory_space<vmem>>, vector<32x32xbf16>
    %cst_20 = arith.constant dense<0.000000e+00> : vector<2x32xf32>
    %38 = tpu.matmul %36, %37, %cst_20 {dimension_numbers = #tpu.dot_dimension_numbers<[1], [0], [0], [1], [0, 0, 1, 1], [], []>} : vector<2x32xbf16>, vector<32x32xbf16>, vector<2x32xf32> -> vector<2x32xf32>
    %39 = arith.addf %35, %38 : vector<2x32xf32>
    %40 = math.tanh %39 : vector<2x32xf32>
    %41 = arith.truncf %40 : vector<2x32xf32> to vector<2x32xbf16>
    %42 = arith.index_cast %c2_i32 : i32 to index
    %c0_21 = arith.constant 0 : index
    %c0_22 = arith.constant 0 : index
    %43 = vector.load %arg4[%42, %c0_21, %c0_22] : memref<8x2x32xbf16, #tpu.memory_space<vmem>>, vector<1x2x32xbf16>
    %44 = vector.shape_cast %43 : vector<1x2x32xbf16> to vector<2x32xbf16>
    %45 = vector.shape_cast %41 : vector<2x32xbf16> to vector<1x2x32xbf16>
    tpu.vector_store %arg4[%42, %c0_21, %c0_22], %45 {strides = array<i32>} : memref<8x2x32xbf16, #tpu.memory_space<vmem>>, vector<1x2x32xbf16>,
    %c3_i32 = arith.constant 3 : i32
    %46 = arith.index_cast %c3_i32 : i32 to index
    %c0_23 = arith.constant 0 : index
    %c0_24 = arith.constant 0 : index
    %47 = vector.load %arg2[%46, %c0_23, %c0_24] : memref<8x2x32xbf16, #tpu.memory_space<vmem>>, vector<1x2x32xbf16>
    %48 = vector.shape_cast %47 : vector<1x2x32xbf16> to vector<2x32xbf16>
    %49 = arith.extf %48 : vector<2x32xbf16> to vector<2x32xf32>
    %50 = arith.truncf %40 : vector<2x32xf32> to vector<2x32xbf16>
    %c0_25 = arith.constant 0 : index
    %c0_26 = arith.constant 0 : index
    %51 = vector.load %arg5[%c0_25, %c0_26] : memref<32x32xbf16, #tpu.memory_space<vmem>>, vector<32x32xbf16>
    %cst_27 = arith.constant dense<0.000000e+00> : vector<2x32xf32>
    %52 = tpu.matmul %50, %51, %cst_27 {dimension_numbers = #tpu.dot_dimension_numbers<[1], [0], [0], [1], [0, 0, 1, 1], [], []>} : vector<2x32xbf16>, vector<32x32xbf16>, vector<2x32xf32> -> vector<2x32xf32>
    %53 = arith.addf %49, %52 : vector<2x32xf32>
    %54 = math.tanh %53 : vector<2x32xf32>
    %55 = arith.truncf %54 : vector<2x32xf32> to vector<2x32xbf16>
    %56 = arith.index_cast %c3_i32 : i32 to index
    %c0_28 = arith.constant 0 : index
    %c0_29 = arith.constant 0 : index
    %57 = vector.load %arg4[%56, %c0_28, %c0_29] : memref<8x2x32xbf16, #tpu.memory_space<vmem>>, vector<1x2x32xbf16>
    %58 = vector.shape_cast %57 : vector<1x2x32xbf16> to vector<2x32xbf16>
    %59 = vector.shape_cast %55 : vector<2x32xbf16> to vector<1x2x32xbf16>
    tpu.vector_store %arg4[%56, %c0_28, %c0_29], %59 {strides = array<i32>} : memref<8x2x32xbf16, #tpu.memory_space<vmem>>, vector<1x2x32xbf16>,
    %c4_i32 = arith.constant 4 : i32
    %60 = arith.index_cast %c4_i32 : i32 to index
    %c0_30 = arith.constant 0 : index
    %c0_31 = arith.constant 0 : index
    %61 = vector.load %arg2[%60, %c0_30, %c0_31] : memref<8x2x32xbf16, #tpu.memory_space<vmem>>, vector<1x2x32xbf16>
    %62 = vector.shape_cast %61 : vector<1x2x32xbf16> to vector<2x32xbf16>
    %63 = arith.extf %62 : vector<2x32xbf16> to vector<2x32xf32>
    %64 = arith.truncf %54 : vector<2x32xf32> to vector<2x32xbf16>
    %c0_32 = arith.constant 0 : index
    %c0_33 = arith.constant 0 : index
    %65 = vector.load %arg5[%c0_32, %c0_33] : memref<32x32xbf16, #tpu.memory_space<vmem>>, vector<32x32xbf16>
    %cst_34 = arith.constant dense<0.000000e+00> : vector<2x32xf32>
    %66 = tpu.matmul %64, %65, %cst_34 {dimension_numbers = #tpu.dot_dimension_numbers<[1], [0], [0], [1], [0, 0, 1, 1], [], []>} : vector<2x32xbf16>, vector<32x32xbf16>, vector<2x32xf32> -> vector<2x32xf32>
    %67 = arith.addf %63, %66 : vector<2x32xf32>
    %68 = math.tanh %67 : vector<2x32xf32>
    %69 = arith.truncf %68 : vector<2x32xf32> to vector<2x32xbf16>
    %70 = arith.index_cast %c4_i32 : i32 to index
    %c0_35 = arith.constant 0 : index
    %c0_36 = arith.constant 0 : index
    %71 = vector.load %arg4[%70, %c0_35, %c0_36] : memref<8x2x32xbf16, #tpu.memory_space<vmem>>, vector<1x2x32xbf16>
    %72 = vector.shape_cast %71 : vector<1x2x32xbf16> to vector<2x32xbf16>
    %73 = vector.shape_cast %69 : vector<2x32xbf16> to vector<1x2x32xbf16>
    tpu.vector_store %arg4[%70, %c0_35, %c0_36], %73 {strides = array<i32>} : memref<8x2x32xbf16, #tpu.memory_space<vmem>>, vector<1x2x32xbf16>,
    %c5_i32 = arith.constant 5 : i32
    %74 = arith.index_cast %c5_i32 : i32 to index
    %c0_37 = arith.constant 0 : index
    %c0_38 = arith.constant 0 : index
    %75 = vector.load %arg2[%74, %c0_37, %c0_38] : memref<8x2x32xbf16, #tpu.memory_space<vmem>>, vector<1x2x32xbf16>
    %76 = vector.shape_cast %75 : vector<1x2x32xbf16> to vector<2x32xbf16>
    %77 = arith.extf %76 : vector<2x32xbf16> to vector<2x32xf32>
    %78 = arith.truncf %68 : vector<2x32xf32> to vector<2x32xbf16>
    %c0_39 = arith.constant 0 : index
    %c0_40 = arith.constant 0 : index
    %79 = vector.load %arg5[%c0_39, %c0_40] : memref<32x32xbf16, #tpu.memory_space<vmem>>, vector<32x32xbf16>
    %cst_41 = arith.constant dense<0.000000e+00> : vector<2x32xf32>
    %80 = tpu.matmul %78, %79, %cst_41 {dimension_numbers = #tpu.dot_dimension_numbers<[1], [0], [0], [1], [0, 0, 1, 1], [], []>} : vector<2x32xbf16>, vector<32x32xbf16>, vector<2x32xf32> -> vector<2x32xf32>
    %81 = arith.addf %77, %80 : vector<2x32xf32>
    %82 = math.tanh %81 : vector<2x32xf32>
    %83 = arith.truncf %82 : vector<2x32xf32> to vector<2x32xbf16>
    %84 = arith.index_cast %c5_i32 : i32 to index
    %c0_42 = arith.constant 0 : index
    %c0_43 = arith.constant 0 : index
    %85 = vector.load %arg4[%84, %c0_42, %c0_43] : memref<8x2x32xbf16, #tpu.memory_space<vmem>>, vector<1x2x32xbf16>
    %86 = vector.shape_cast %85 : vector<1x2x32xbf16> to vector<2x32xbf16>
    %87 = vector.shape_cast %83 : vector<2x32xbf16> to vector<1x2x32xbf16>
    tpu.vector_store %arg4[%84, %c0_42, %c0_43], %87 {strides = array<i32>} : memref<8x2x32xbf16, #tpu.memory_space<vmem>>, vector<1x2x32xbf16>,
    %c6_i32 = arith.constant 6 : i32
    %88 = arith.index_cast %c6_i32 : i32 to index
    %c0_44 = arith.constant 0 : index
    %c0_45 = arith.constant 0 : index
    %89 = vector.load %arg2[%88, %c0_44, %c0_45] : memref<8x2x32xbf16, #tpu.memory_space<vmem>>, vector<1x2x32xbf16>
    %90 = vector.shape_cast %89 : vector<1x2x32xbf16> to vector<2x32xbf16>
    %91 = arith.extf %90 : vector<2x32xbf16> to vector<2x32xf32>
    %92 = arith.truncf %82 : vector<2x32xf32> to vector<2x32xbf16>
    %c0_46 = arith.constant 0 : index
    %c0_47 = arith.constant 0 : index
    %93 = vector.load %arg5[%c0_46, %c0_47] : memref<32x32xbf16, #tpu.memory_space<vmem>>, vector<32x32xbf16>
    %cst_48 = arith.constant dense<0.000000e+00> : vector<2x32xf32>
    %94 = tpu.matmul %92, %93, %cst_48 {dimension_numbers = #tpu.dot_dimension_numbers<[1], [0], [0], [1], [0, 0, 1, 1], [], []>} : vector<2x32xbf16>, vector<32x32xbf16>, vector<2x32xf32> -> vector<2x32xf32>
    %95 = arith.addf %91, %94 : vector<2x32xf32>
    %96 = math.tanh %95 : vector<2x32xf32>
    %97 = arith.truncf %96 : vector<2x32xf32> to vector<2x32xbf16>
    %98 = arith.index_cast %c6_i32 : i32 to index
    %c0_49 = arith.constant 0 : index
    %c0_50 = arith.constant 0 : index
    %99 = vector.load %arg4[%98, %c0_49, %c0_50] : memref<8x2x32xbf16, #tpu.memory_space<vmem>>, vector<1x2x32xbf16>
    %100 = vector.shape_cast %99 : vector<1x2x32xbf16> to vector<2x32xbf16>
    %101 = vector.shape_cast %97 : vector<2x32xbf16> to vector<1x2x32xbf16>
    tpu.vector_store %arg4[%98, %c0_49, %c0_50], %101 {strides = array<i32>} : memref<8x2x32xbf16, #tpu.memory_space<vmem>>, vector<1x2x32xbf16>,
    %c7_i32 = arith.constant 7 : i32
    %102 = arith.index_cast %c7_i32 : i32 to index
    %c0_51 = arith.constant 0 : index
    %c0_52 = arith.constant 0 : index
    %103 = vector.load %arg2[%102, %c0_51, %c0_52] : memref<8x2x32xbf16, #tpu.memory_space<vmem>>, vector<1x2x32xbf16>
    %104 = vector.shape_cast %103 : vector<1x2x32xbf16> to vector<2x32xbf16>
    %105 = arith.extf %104 : vector<2x32xbf16> to vector<2x32xf32>
    %106 = arith.truncf %96 : vector<2x32xf32> to vector<2x32xbf16>
    %c0_53 = arith.constant 0 : index
    %c0_54 = arith.constant 0 : index
    %107 = vector.load %arg5[%c0_53, %c0_54] : memref<32x32xbf16, #tpu.memory_space<vmem>>, vector<32x32xbf16>
    %cst_55 = arith.constant dense<0.000000e+00> : vector<2x32xf32>
    %108 = tpu.matmul %106, %107, %cst_55 {dimension_numbers = #tpu.dot_dimension_numbers<[1], [0], [0], [1], [0, 0, 1, 1], [], []>} : vector<2x32xbf16>, vector<32x32xbf16>, vector<2x32xf32> -> vector<2x32xf32>
    %109 = arith.addf %105, %108 : vector<2x32xf32>
    %110 = math.tanh %109 : vector<2x32xf32>
    %111 = arith.truncf %110 : vector<2x32xf32> to vector<2x32xbf16>
    %112 = arith.index_cast %c7_i32 : i32 to index
    %c0_56 = arith.constant 0 : index
    %c0_57 = arith.constant 0 : index
    %113 = vector.load %arg4[%112, %c0_56, %c0_57] : memref<8x2x32xbf16, #tpu.memory_space<vmem>>, vector<1x2x32xbf16>
    %114 = vector.shape_cast %113 : vector<1x2x32xbf16> to vector<2x32xbf16>
    %115 = vector.shape_cast %111 : vector<2x32xbf16> to vector<1x2x32xbf16>
    tpu.vector_store %arg4[%112, %c0_56, %c0_57], %115 {strides = array<i32>} : memref<8x2x32xbf16, #tpu.memory_space<vmem>>, vector<1x2x32xbf16>,
    %c8_i32 = arith.constant 8 : i32
    %c0_58 = arith.constant 0 : index
    %c0_59 = arith.constant 0 : index
    %116 = vector.load %arg6[%c0_58, %c0_59] : memref<2x32xf32, #tpu.memory_space<vmem>>, vector<2x32xf32>
    tpu.vector_store %arg6[%c0_58, %c0_59], %110 {strides = array<i32>} : memref<2x32xf32, #tpu.memory_space<vmem>>, vector<2x32xf32>,
    return
  }
  func.func @transform_0(%arg0: i32, %arg1: i32) -> (i32, i32, i32) {
    %c0_i32 = arith.constant 0 : i32
    %c0_i32_0 = arith.constant 0 : i32
    return %arg1, %arg0, %c0_i32 : i32, i32, i32
  }
  func.func @transform_2(%arg0: i32, %arg1: i32) -> (i32, i32, i32) {
    %c0_i32 = arith.constant 0 : i32
    %c0_i32_0 = arith.constant 0 : i32
    return %arg1, %arg0, %c0_i32 : i32, i32, i32
  }
}

module attributes {stable_mosaic.version = 11 : i64} {
  func.func @_vocab_head_kernel(%arg0: i32, %arg1: i32, %arg2: memref<8x2x32xbf16, #tpu.memory_space<vmem>>, %arg3: memref<32x64xbf16, #tpu.memory_space<vmem>>, %arg4: memref<1x64xf32, #tpu.memory_space<vmem>>, %arg5: memref<2x8x64xf32, #tpu.memory_space<vmem>>) attributes {dimension_semantics = [#tpu.dimension_semantics<parallel>, #tpu.dimension_semantics<parallel>], iteration_bounds = array<i64: 1, 1>, scalar_prefetch = 0 : i64, scratch_operands = 0 : i64, tpu.core_type = #tpu.core_type<tc>, window_params = [{transform_indices = @transform_0, window_bounds = array<i64: 8, 2, 32>}, {transform_indices = @transform_1, window_bounds = array<i64: 32, 64>}, {transform_indices = @transform_2, window_bounds = array<i64: 1, 64>}, {transform_indices = @transform_3, window_bounds = array<i64: 2, 8, 64>}]} {
    %c0 = arith.constant 0 : index
    %c0_0 = arith.constant 0 : index
    %c0_1 = arith.constant 0 : index
    %0 = vector.load %arg2[%c0, %c0_0, %c0_1] : memref<8x2x32xbf16, #tpu.memory_space<vmem>>, vector<1x2x32xbf16>
    %1 = vector.shape_cast %0 : vector<1x2x32xbf16> to vector<2x32xbf16>
    %c0_2 = arith.constant 0 : index
    %c0_3 = arith.constant 0 : index
    %2 = vector.load %arg3[%c0_2, %c0_3] : memref<32x64xbf16, #tpu.memory_space<vmem>>, vector<32x64xbf16>
    %cst = arith.constant dense<0.000000e+00> : vector<2x64xf32>
    %3 = tpu.matmul %1, %2, %cst {dimension_numbers = #tpu.dot_dimension_numbers<[1], [0], [0], [1], [0, 0, 1, 1], [], []>} : vector<2x32xbf16>, vector<32x64xbf16>, vector<2x64xf32> -> vector<2x64xf32>
    %c0_4 = arith.constant 0 : index
    %c0_5 = arith.constant 0 : index
    %4 = vector.load %arg4[%c0_4, %c0_5] : memref<1x64xf32, #tpu.memory_space<vmem>>, vector<1x64xf32>
    %5 = vector.broadcast %4 : vector<1x64xf32> to vector<2x64xf32>
    %6 = arith.addf %3, %5 : vector<2x64xf32>
    %c0_6 = arith.constant 0 : index
    %c0_7 = arith.constant 0 : index
    %c0_8 = arith.constant 0 : index
    %7 = vector.load %arg5[%c0_6, %c0_7, %c0_8] : memref<2x8x64xf32, #tpu.memory_space<vmem>>, vector<2x1x64xf32>
    %8 = vector.shape_cast %7 : vector<2x1x64xf32> to vector<2x64xf32>
    %9 = vector.shape_cast %6 : vector<2x64xf32> to vector<2x1x64xf32>
    tpu.vector_store %arg5[%c0_6, %c0_7, %c0_8], %9 {strides = array<i32>} : memref<2x8x64xf32, #tpu.memory_space<vmem>>, vector<2x1x64xf32>,
    %c1 = arith.constant 1 : index
    %c0_9 = arith.constant 0 : index
    %c0_10 = arith.constant 0 : index
    %10 = vector.load %arg2[%c1, %c0_9, %c0_10] : memref<8x2x32xbf16, #tpu.memory_space<vmem>>, vector<1x2x32xbf16>
    %11 = vector.shape_cast %10 : vector<1x2x32xbf16> to vector<2x32xbf16>
    %c0_11 = arith.constant 0 : index
    %c0_12 = arith.constant 0 : index
    %12 = vector.load %arg3[%c0_11, %c0_12] : memref<32x64xbf16, #tpu.memory_space<vmem>>, vector<32x64xbf16>
    %cst_13 = arith.constant dense<0.000000e+00> : vector<2x64xf32>
    %13 = tpu.matmul %11, %12, %cst_13 {dimension_numbers = #tpu.dot_dimension_numbers<[1], [0], [0], [1], [0, 0, 1, 1], [], []>} : vector<2x32xbf16>, vector<32x64xbf16>, vector<2x64xf32> -> vector<2x64xf32>
    %c0_14 = arith.constant 0 : index
    %c0_15 = arith.constant 0 : index
    %14 = vector.load %arg4[%c0_14, %c0_15] : memref<1x64xf32, #tpu.memory_space<vmem>>, vector<1x64xf32>
    %15 = vector.broadcast %14 : vector<1x64xf32> to vector<2x64xf32>
    %16 = arith.addf %13, %15 : vector<2x64xf32>
    %c0_16 = arith.constant 0 : index
    %c1_17 = arith.constant 1 : index
    %c0_18 = arith.constant 0 : index
    %17 = vector.load %arg5[%c0_16, %c1_17, %c0_18] : memref<2x8x64xf32, #tpu.memory_space<vmem>>, vector<2x1x64xf32>
    %18 = vector.shape_cast %17 : vector<2x1x64xf32> to vector<2x64xf32>
    %19 = vector.shape_cast %16 : vector<2x64xf32> to vector<2x1x64xf32>
    tpu.vector_store %arg5[%c0_16, %c1_17, %c0_18], %19 {strides = array<i32>} : memref<2x8x64xf32, #tpu.memory_space<vmem>>, vector<2x1x64xf32>,
    %c2 = arith.constant 2 : index
    %c0_19 = arith.constant 0 : index
    %c0_20 = arith.constant 0 : index
    %20 = vector.load %arg2[%c2, %c0_19, %c0_20] : memref<8x2x32xbf16, #tpu.memory_space<vmem>>, vector<1x2x32xbf16>
    %21 = vector.shape_cast %20 : vector<1x2x32xbf16> to vector<2x32xbf16>
    %c0_21 = arith.constant 0 : index
    %c0_22 = arith.constant 0 : index
    %22 = vector.load %arg3[%c0_21, %c0_22] : memref<32x64xbf16, #tpu.memory_space<vmem>>, vector<32x64xbf16>
    %cst_23 = arith.constant dense<0.000000e+00> : vector<2x64xf32>
    %23 = tpu.matmul %21, %22, %cst_23 {dimension_numbers = #tpu.dot_dimension_numbers<[1], [0], [0], [1], [0, 0, 1, 1], [], []>} : vector<2x32xbf16>, vector<32x64xbf16>, vector<2x64xf32> -> vector<2x64xf32>
    %c0_24 = arith.constant 0 : index
    %c0_25 = arith.constant 0 : index
    %24 = vector.load %arg4[%c0_24, %c0_25] : memref<1x64xf32, #tpu.memory_space<vmem>>, vector<1x64xf32>
    %25 = vector.broadcast %24 : vector<1x64xf32> to vector<2x64xf32>
    %26 = arith.addf %23, %25 : vector<2x64xf32>
    %c0_26 = arith.constant 0 : index
    %c2_27 = arith.constant 2 : index
    %c0_28 = arith.constant 0 : index
    %27 = vector.load %arg5[%c0_26, %c2_27, %c0_28] : memref<2x8x64xf32, #tpu.memory_space<vmem>>, vector<2x1x64xf32>
    %28 = vector.shape_cast %27 : vector<2x1x64xf32> to vector<2x64xf32>
    %29 = vector.shape_cast %26 : vector<2x64xf32> to vector<2x1x64xf32>
    tpu.vector_store %arg5[%c0_26, %c2_27, %c0_28], %29 {strides = array<i32>} : memref<2x8x64xf32, #tpu.memory_space<vmem>>, vector<2x1x64xf32>,
    %c3 = arith.constant 3 : index
    %c0_29 = arith.constant 0 : index
    %c0_30 = arith.constant 0 : index
    %30 = vector.load %arg2[%c3, %c0_29, %c0_30] : memref<8x2x32xbf16, #tpu.memory_space<vmem>>, vector<1x2x32xbf16>
    %31 = vector.shape_cast %30 : vector<1x2x32xbf16> to vector<2x32xbf16>
    %c0_31 = arith.constant 0 : index
    %c0_32 = arith.constant 0 : index
    %32 = vector.load %arg3[%c0_31, %c0_32] : memref<32x64xbf16, #tpu.memory_space<vmem>>, vector<32x64xbf16>
    %cst_33 = arith.constant dense<0.000000e+00> : vector<2x64xf32>
    %33 = tpu.matmul %31, %32, %cst_33 {dimension_numbers = #tpu.dot_dimension_numbers<[1], [0], [0], [1], [0, 0, 1, 1], [], []>} : vector<2x32xbf16>, vector<32x64xbf16>, vector<2x64xf32> -> vector<2x64xf32>
    %c0_34 = arith.constant 0 : index
    %c0_35 = arith.constant 0 : index
    %34 = vector.load %arg4[%c0_34, %c0_35] : memref<1x64xf32, #tpu.memory_space<vmem>>, vector<1x64xf32>
    %35 = vector.broadcast %34 : vector<1x64xf32> to vector<2x64xf32>
    %36 = arith.addf %33, %35 : vector<2x64xf32>
    %c0_36 = arith.constant 0 : index
    %c3_37 = arith.constant 3 : index
    %c0_38 = arith.constant 0 : index
    %37 = vector.load %arg5[%c0_36, %c3_37, %c0_38] : memref<2x8x64xf32, #tpu.memory_space<vmem>>, vector<2x1x64xf32>
    %38 = vector.shape_cast %37 : vector<2x1x64xf32> to vector<2x64xf32>
    %39 = vector.shape_cast %36 : vector<2x64xf32> to vector<2x1x64xf32>
    tpu.vector_store %arg5[%c0_36, %c3_37, %c0_38], %39 {strides = array<i32>} : memref<2x8x64xf32, #tpu.memory_space<vmem>>, vector<2x1x64xf32>,
    %c4 = arith.constant 4 : index
    %c0_39 = arith.constant 0 : index
    %c0_40 = arith.constant 0 : index
    %40 = vector.load %arg2[%c4, %c0_39, %c0_40] : memref<8x2x32xbf16, #tpu.memory_space<vmem>>, vector<1x2x32xbf16>
    %41 = vector.shape_cast %40 : vector<1x2x32xbf16> to vector<2x32xbf16>
    %c0_41 = arith.constant 0 : index
    %c0_42 = arith.constant 0 : index
    %42 = vector.load %arg3[%c0_41, %c0_42] : memref<32x64xbf16, #tpu.memory_space<vmem>>, vector<32x64xbf16>
    %cst_43 = arith.constant dense<0.000000e+00> : vector<2x64xf32>
    %43 = tpu.matmul %41, %42, %cst_43 {dimension_numbers = #tpu.dot_dimension_numbers<[1], [0], [0], [1], [0, 0, 1, 1], [], []>} : vector<2x32xbf16>, vector<32x64xbf16>, vector<2x64xf32> -> vector<2x64xf32>
    %c0_44 = arith.constant 0 : index
    %c0_45 = arith.constant 0 : index
    %44 = vector.load %arg4[%c0_44, %c0_45] : memref<1x64xf32, #tpu.memory_space<vmem>>, vector<1x64xf32>
    %45 = vector.broadcast %44 : vector<1x64xf32> to vector<2x64xf32>
    %46 = arith.addf %43, %45 : vector<2x64xf32>
    %c0_46 = arith.constant 0 : index
    %c4_47 = arith.constant 4 : index
    %c0_48 = arith.constant 0 : index
    %47 = vector.load %arg5[%c0_46, %c4_47, %c0_48] : memref<2x8x64xf32, #tpu.memory_space<vmem>>, vector<2x1x64xf32>
    %48 = vector.shape_cast %47 : vector<2x1x64xf32> to vector<2x64xf32>
    %49 = vector.shape_cast %46 : vector<2x64xf32> to vector<2x1x64xf32>
    tpu.vector_store %arg5[%c0_46, %c4_47, %c0_48], %49 {strides = array<i32>} : memref<2x8x64xf32, #tpu.memory_space<vmem>>, vector<2x1x64xf32>,
    %c5 = arith.constant 5 : index
    %c0_49 = arith.constant 0 : index
    %c0_50 = arith.constant 0 : index
    %50 = vector.load %arg2[%c5, %c0_49, %c0_50] : memref<8x2x32xbf16, #tpu.memory_space<vmem>>, vector<1x2x32xbf16>
    %51 = vector.shape_cast %50 : vector<1x2x32xbf16> to vector<2x32xbf16>
    %c0_51 = arith.constant 0 : index
    %c0_52 = arith.constant 0 : index
    %52 = vector.load %arg3[%c0_51, %c0_52] : memref<32x64xbf16, #tpu.memory_space<vmem>>, vector<32x64xbf16>
    %cst_53 = arith.constant dense<0.000000e+00> : vector<2x64xf32>
    %53 = tpu.matmul %51, %52, %cst_53 {dimension_numbers = #tpu.dot_dimension_numbers<[1], [0], [0], [1], [0, 0, 1, 1], [], []>} : vector<2x32xbf16>, vector<32x64xbf16>, vector<2x64xf32> -> vector<2x64xf32>
    %c0_54 = arith.constant 0 : index
    %c0_55 = arith.constant 0 : index
    %54 = vector.load %arg4[%c0_54, %c0_55] : memref<1x64xf32, #tpu.memory_space<vmem>>, vector<1x64xf32>
    %55 = vector.broadcast %54 : vector<1x64xf32> to vector<2x64xf32>
    %56 = arith.addf %53, %55 : vector<2x64xf32>
    %c0_56 = arith.constant 0 : index
    %c5_57 = arith.constant 5 : index
    %c0_58 = arith.constant 0 : index
    %57 = vector.load %arg5[%c0_56, %c5_57, %c0_58] : memref<2x8x64xf32, #tpu.memory_space<vmem>>, vector<2x1x64xf32>
    %58 = vector.shape_cast %57 : vector<2x1x64xf32> to vector<2x64xf32>
    %59 = vector.shape_cast %56 : vector<2x64xf32> to vector<2x1x64xf32>
    tpu.vector_store %arg5[%c0_56, %c5_57, %c0_58], %59 {strides = array<i32>} : memref<2x8x64xf32, #tpu.memory_space<vmem>>, vector<2x1x64xf32>,
    %c6 = arith.constant 6 : index
    %c0_59 = arith.constant 0 : index
    %c0_60 = arith.constant 0 : index
    %60 = vector.load %arg2[%c6, %c0_59, %c0_60] : memref<8x2x32xbf16, #tpu.memory_space<vmem>>, vector<1x2x32xbf16>
    %61 = vector.shape_cast %60 : vector<1x2x32xbf16> to vector<2x32xbf16>
    %c0_61 = arith.constant 0 : index
    %c0_62 = arith.constant 0 : index
    %62 = vector.load %arg3[%c0_61, %c0_62] : memref<32x64xbf16, #tpu.memory_space<vmem>>, vector<32x64xbf16>
    %cst_63 = arith.constant dense<0.000000e+00> : vector<2x64xf32>
    %63 = tpu.matmul %61, %62, %cst_63 {dimension_numbers = #tpu.dot_dimension_numbers<[1], [0], [0], [1], [0, 0, 1, 1], [], []>} : vector<2x32xbf16>, vector<32x64xbf16>, vector<2x64xf32> -> vector<2x64xf32>
    %c0_64 = arith.constant 0 : index
    %c0_65 = arith.constant 0 : index
    %64 = vector.load %arg4[%c0_64, %c0_65] : memref<1x64xf32, #tpu.memory_space<vmem>>, vector<1x64xf32>
    %65 = vector.broadcast %64 : vector<1x64xf32> to vector<2x64xf32>
    %66 = arith.addf %63, %65 : vector<2x64xf32>
    %c0_66 = arith.constant 0 : index
    %c6_67 = arith.constant 6 : index
    %c0_68 = arith.constant 0 : index
    %67 = vector.load %arg5[%c0_66, %c6_67, %c0_68] : memref<2x8x64xf32, #tpu.memory_space<vmem>>, vector<2x1x64xf32>
    %68 = vector.shape_cast %67 : vector<2x1x64xf32> to vector<2x64xf32>
    %69 = vector.shape_cast %66 : vector<2x64xf32> to vector<2x1x64xf32>
    tpu.vector_store %arg5[%c0_66, %c6_67, %c0_68], %69 {strides = array<i32>} : memref<2x8x64xf32, #tpu.memory_space<vmem>>, vector<2x1x64xf32>,
    %c7 = arith.constant 7 : index
    %c0_69 = arith.constant 0 : index
    %c0_70 = arith.constant 0 : index
    %70 = vector.load %arg2[%c7, %c0_69, %c0_70] : memref<8x2x32xbf16, #tpu.memory_space<vmem>>, vector<1x2x32xbf16>
    %71 = vector.shape_cast %70 : vector<1x2x32xbf16> to vector<2x32xbf16>
    %c0_71 = arith.constant 0 : index
    %c0_72 = arith.constant 0 : index
    %72 = vector.load %arg3[%c0_71, %c0_72] : memref<32x64xbf16, #tpu.memory_space<vmem>>, vector<32x64xbf16>
    %cst_73 = arith.constant dense<0.000000e+00> : vector<2x64xf32>
    %73 = tpu.matmul %71, %72, %cst_73 {dimension_numbers = #tpu.dot_dimension_numbers<[1], [0], [0], [1], [0, 0, 1, 1], [], []>} : vector<2x32xbf16>, vector<32x64xbf16>, vector<2x64xf32> -> vector<2x64xf32>
    %c0_74 = arith.constant 0 : index
    %c0_75 = arith.constant 0 : index
    %74 = vector.load %arg4[%c0_74, %c0_75] : memref<1x64xf32, #tpu.memory_space<vmem>>, vector<1x64xf32>
    %75 = vector.broadcast %74 : vector<1x64xf32> to vector<2x64xf32>
    %76 = arith.addf %73, %75 : vector<2x64xf32>
    %c0_76 = arith.constant 0 : index
    %c7_77 = arith.constant 7 : index
    %c0_78 = arith.constant 0 : index
    %77 = vector.load %arg5[%c0_76, %c7_77, %c0_78] : memref<2x8x64xf32, #tpu.memory_space<vmem>>, vector<2x1x64xf32>
    %78 = vector.shape_cast %77 : vector<2x1x64xf32> to vector<2x64xf32>
    %79 = vector.shape_cast %76 : vector<2x64xf32> to vector<2x1x64xf32>
    tpu.vector_store %arg5[%c0_76, %c7_77, %c0_78], %79 {strides = array<i32>} : memref<2x8x64xf32, #tpu.memory_space<vmem>>, vector<2x1x64xf32>,
    return
  }
  func.func @transform_0(%arg0: i32, %arg1: i32) -> (i32, i32, i32) {
    %c0_i32 = arith.constant 0 : i32
    %c0_i32_0 = arith.constant 0 : i32
    %c0_i32_1 = arith.constant 0 : i32
    return %arg1, %c0_i32, %c0_i32_0 : i32, i32, i32
  }
  func.func @transform_1(%arg0: i32, %arg1: i32) -> (i32, i32) {
    %c0_i32 = arith.constant 0 : i32
    %c0_i32_0 = arith.constant 0 : i32
    return %c0_i32, %arg0 : i32, i32
  }
  func.func @transform_2(%arg0: i32, %arg1: i32) -> (i32, i32) {
    %c0_i32 = arith.constant 0 : i32
    %c0_i32_0 = arith.constant 0 : i32
    return %c0_i32, %arg0 : i32, i32
  }
  func.func @transform_3(%arg0: i32, %arg1: i32) -> (i32, i32, i32) {
    %c0_i32 = arith.constant 0 : i32
    %c0_i32_0 = arith.constant 0 : i32
    return %c0_i32, %arg1, %arg0 : i32, i32, i32
  }
}

</mosaic_0001>

<llo_original>
// kernel: rnn_language_model_forward.4
$region0: #{rnn_language_model_forward.4}
  #allocation0 [shape = 'u32[]', space=smem, size = 0x4, offset = 0x4, fixed_abs, tag = 'smem constant byte address 0x4 - core index']
  #allocation1 [shape = 'u32[144,128]{1,0:T(1,128)}', space=vmem, size = 0x12000, scoped, tag = 'internal scratch']
  #allocation2 [shape = 'bf16[32,32]{1,0:T(16,128)(2,1)}', space=vmem, size = 0x2000, scoped, tag = 'scratch operand']
  #allocation3 [shape = 'f32[2,32]{1,0:T(2,128)}', space=vmem, size = 0x400, scoped, tag = 'scratch operand']
  #allocation7 [shape = 's32[]', space=sflag, size = 0x4, offset = 0, fixed_abs, tag = 'sflag constant byte address 0x0 - dummy sync flag']
  %s0 = inlined_call_operand.vmem [shape: bf16[8,2,32], index: 0, kind: input, shape index: {}]
  %s1 = inlined_call_operand.vmem [shape: bf16[32,32], index: 1, kind: input, shape index: {}]
  %s2 = inlined_call_operand.hbm [shape: bf16[8,2,32], index: 2, kind: output, shape index: {}]
  %s3 = sld [smem:[#allocation0]]
  $region53: #{rnn_language_model_forward.4} parent=0
    _
  %s5 = ssub.s32 1, %s3
  %s6 = scalar_select 0, %s5, %s3
  $region1: #{rnn_language_model_forward.4} parent=0
    #allocation4 [shape = 'u8[4096]{0}', space=vmem, size = 0x1000, scoped, tag = 'output window, operand 0, single buffered']
    #allocation5 [shape = 's32[1]{0}', space=sflag, size = 0x4, scoped, tag = 'scoped memory for rnn_language_model_forward.4']
    %7 = vsyncpa [#allocation5], 0
    // Predicated region
    $region2: #{rnn_language_model_forward.4} parent=1 // pred_check
      _
    $region3: #{rnn_language_model_forward.4} parent=1 // pred_check_branch
      %9 = sbr.rel (0) target = $region5
    $region4: #{rnn_language_model_forward.4} parent=1 // pred_region
      _
    $region5: #{rnn_language_model_forward.4} parent=1 // pred_fallthru
      _
    %p11 = scmp.eq.s32.totalorder 0, 0
    // Predicated region
    $region6: #{rnn_language_model_forward.4} parent=1 // pred_check
      %p12 = pneg %p11
    $region7: #{rnn_language_model_forward.4} parent=1 // pred_check_branch
      %14 = sbr.rel (%p12) target = $region9
    $region8: #{rnn_language_model_forward.4} parent=1 // pred_region
      $region10: #{rnn_language_model_forward.4} parent=8
        #allocation6 [shape = 's32[1]{0}', space=sflag, size = 0x4, scoped, tag = 'scoped memory for rnn_language_model_forward.4']
        %p16 = scmp.lt.u32.totalorder 16, 8
        %p17 = pneg %p16
        // Predicated region
        $region11: #{rnn_language_model_forward.4} parent=10 // pred_check
          _
        $region12: #{rnn_language_model_forward.4} parent=10 // pred_check_branch
          %19 = sbr.rel (%p16) target = $region14
        $region13: #{rnn_language_model_forward.4} parent=10 // pred_region
          %s34 = sand.u32 16, 7
          %p35 = scmp.eq.s32.totalorder %s34, 0
          // Predicated region
          $region26: #{rnn_language_model_forward.4} parent=13 // pred_check
            %p36 = pneg %p35
          $region27: #{rnn_language_model_forward.4} parent=13 // pred_check_branch
            %38 = sbr.rel (%p36) target = $region29
          $region28: #{rnn_language_model_forward.4} parent=13 // pred_region
            loop: start=0, step=1, limit=1
            $region30: #{rnn_language_model_forward.4} parent=28 // loop_pre_header
              _
            $region31: #{rnn_language_model_forward.4} parent=28 // loop_header
              %s40 = sphi 0, %s44
              %p41 = scmp.ge.s32.totalorder %s40, 1
              %s45 = sphi %s1, %s1
              %s46 = sphi [#allocation2], [#allocation2]
            $region32: #{rnn_language_model_forward.4} parent=28 // loop_header_branch
              %43 = sbr.rel (%p41) target = $region36
            $region33: #{rnn_language_model_forward.4} parent=28 // loop_body
              %v47 = vld [vmem:[%s45] sm:$0xff]
              %48 = vst [vmem:[%s46] sm:$0xff] %v47
              %v49 = vld [vmem:[%s45 + $0x8] sm:$0xff]
              %50 = vst [vmem:[%s46 + $0x8] sm:$0xff] %v49
            $region34: #{rnn_language_model_forward.4} parent=28 // loop_footer
              %s44 = sadd.s32 1, %s40
            $region35: #{rnn_language_model_forward.4} parent=28 // loop_footer_branch
              %39 = sbr.rel target = $region31
            $region36: #{rnn_language_model_forward.4} parent=28 // loop_exit
              _
          $region29: #{rnn_language_model_forward.4} parent=13 // pred_fallthru
            _
          %p51 = pneg %p35
          // Predicated region
          $region37: #{rnn_language_model_forward.4} parent=13 // pred_check
            _
          $region38: #{rnn_language_model_forward.4} parent=13 // pred_check_branch
            %53 = sbr.rel (%p35) target = $region40
          $region39: #{rnn_language_model_forward.4} parent=13 // pred_region
            %s54 = sand.u32 16, 7
          $region40: #{rnn_language_model_forward.4} parent=13 // pred_fallthru
            _
        $region14: #{rnn_language_model_forward.4} parent=10 // pred_fallthru
          _
        // Predicated region
        $region15: #{rnn_language_model_forward.4} parent=10 // pred_check
          %p20 = pneg %p16
        $region16: #{rnn_language_model_forward.4} parent=10 // pred_check_branch
          %22 = sbr.rel (%p20) target = $region18
        $region17: #{rnn_language_model_forward.4} parent=10 // pred_region
          %s23 = sshllo.u32 0, 16
          loop: start=0, step=1, limit=1
          $region19: #{rnn_language_model_forward.4} parent=17 // loop_pre_header
            _
          $region20: #{rnn_language_model_forward.4} parent=17 // loop_header
            %s25 = sphi 0, %s29
            %p26 = scmp.ge.s32.totalorder %s25, 1
            %s30 = sphi %s1, %s1
            %s31 = sphi [#allocation2], [#allocation2]
          $region21: #{rnn_language_model_forward.4} parent=17 // loop_header_branch
            %28 = sbr.rel (%p26) target = $region25
          $region22: #{rnn_language_model_forward.4} parent=17 // loop_body
            %v32 = vld [vmem:[%s30] sm:%s23]
            %33 = vst [vmem:[%s31] sm:%s23] %v32
          $region23: #{rnn_language_model_forward.4} parent=17 // loop_footer
            %s29 = sadd.s32 1, %s25
          $region24: #{rnn_language_model_forward.4} parent=17 // loop_footer_branch
            %24 = sbr.rel target = $region20
          $region25: #{rnn_language_model_forward.4} parent=17 // loop_exit
            _
        $region18: #{rnn_language_model_forward.4} parent=10 // pred_fallthru
          _
        // Predicated region
        $region41: #{rnn_language_model_forward.4} parent=10 // pred_check
          _
        $region42: #{rnn_language_model_forward.4} parent=10 // pred_check_branch
          %57 = sbr.rel (0) target = $region44
        $region43: #{rnn_language_model_forward.4} parent=10 // pred_region
          %58 = vsyncadd [#allocation6], 256
        $region44: #{rnn_language_model_forward.4} parent=10 // pred_fallthru
          _
        %s59 = smul.u32 4, 4
        %s60 = smul.u32 %s59, 1
        %s61 = sshll.u32 %s60, 4
        %62 = dma.done [#allocation6], %s61
      %vm63 = vcmask 254976
      %64 = vst.msk [vmem:[#allocation3] sm:$0x3] %vm63, 0.0
    $region9: #{rnn_language_model_forward.4} parent=1 // pred_fallthru
      _
    %v65 = vld [vmem:[#allocation3] sm:$0x3]
    %v66 = vld [vmem:[%s0] sm:$0x1]
    %v67 = vunpack.c.l.bf16 %v66
    %v68 = vpack.c.bf16 %v65, %v65
    %v69 = vld [vmem:[#allocation2] sm:$0xff]
    %v70 = vld [vmem:[#allocation2 + $0x8] sm:$0xff]
    %vm71 = vcmask 261120
    %v73 = vsel %vm71, %v68, 0
    %75 = vmatprep.subr.bf16.mxu0 0
    %76 = vmatpush1.bf16.msra.mxu0 %v69
    %77 = vmatprep.subr.bf16.mxu0 0
    %78 = vmatpush1.bf16.msra.mxu0 %v70
    %79 = vmatprep.subr.bf16.mxu0 0
    %80 = vmatpush1.bf16.msra.mxu0 0
    %81 = vmatprep.subr.bf16.mxu0 0
    %82 = vmatpush1.bf16.msra.mxu0 0
    %83 = vmatprep.subr.bf16.mxu0 0
    %84 = vmatpush1.bf16.msra.mxu0 0
    %85 = vmatprep.subr.bf16.mxu0 0
    %86 = vmatpush1.bf16.msra.mxu0 0
    %87 = vmatprep.subr.bf16.mxu0 0
    %88 = vmatpush1.bf16.msra.mxu0 0
    %89 = vmatprep.subr.bf16.mxu0 0
    %90 = vmatpush1.bf16.msra.mxu0 0
    %91 = vmatprep.subr.bf16.mxu0 0
    %92 = vmatpush1.bf16.msra.mxu0 0
    %93 = vmatprep.subr.bf16.mxu0 0
    %94 = vmatpush1.bf16.msra.mxu0 0
    %95 = vmatprep.subr.bf16.mxu0 0
    %96 = vmatpush1.bf16.msra.mxu0 0
    %97 = vmatprep.subr.bf16.mxu0 0
    %98 = vmatpush1.bf16.msra.mxu0 0
    %99 = vmatprep.subr.bf16.mxu0 0
    %100 = vmatpush1.bf16.msra.mxu0 0
    %101 = vmatprep.subr.bf16.mxu0 0
    %102 = vmatpush1.bf16.msra.mxu0 0
    %103 = vmatprep.subr.bf16.mxu0 0
    %104 = vmatpush1.bf16.msra.mxu0 0
    %105 = vmatprep.subr.bf16.mxu0 0
    %106 = vmatpush1.bf16.msra.mxu0 0
    %107 = vmatprep.mubr.bf16.mxu0 0
    %108 = vmatmul.mubr.bf16.gmra.mrb[0].mxu0 %v73
    %v109 = vpop.f32.mrb[0].mxu0
    %v110 = vadd.f32 0.0, %v109
    %v111 = vpop.f32.mrb[0].mxu0
    %v112 = vpop.f32.mrb[0].mxu0
    %v113 = vpop.f32.mrb[0].mxu0
    %114 = vdwg.mxu0
    %v115 = vadd.f32 %v67, %v110
    %v116 = vtanh.pop %v115
    %v117 = vpack.c.bf16 %v116, %v116
    %vm118 = vcmask 253952
    %119 = vst.msk [vmem:[#allocation4] sm:$0x1] %vm118, %v117
    %s120 = scalar_lea.vmem %s0, 1
    %v121 = vld [vmem:[%s120] sm:$0x1]
    %v122 = vunpack.c.l.bf16 %v121
    %v123 = vld [vmem:[#allocation2] sm:$0xff]
    %v124 = vld [vmem:[#allocation2 + $0x8] sm:$0xff]
    %v126 = vsel %vm71, %v117, 0
    %128 = vmatprep.subr.bf16.mxu0 0
    %129 = vmatpush1.bf16.msra.mxu0 %v123
    %130 = vmatprep.subr.bf16.mxu0 0
    %131 = vmatpush1.bf16.msra.mxu0 %v124
    %132 = vmatprep.subr.bf16.mxu0 0
    %133 = vmatpush1.bf16.msra.mxu0 0
    %134 = vmatprep.subr.bf16.mxu0 0
    %135 = vmatpush1.bf16.msra.mxu0 0
    %136 = vmatprep.subr.bf16.mxu0 0
    %137 = vmatpush1.bf16.msra.mxu0 0
    %138 = vmatprep.subr.bf16.mxu0 0
    %139 = vmatpush1.bf16.msra.mxu0 0
    %140 = vmatprep.subr.bf16.mxu0 0
    %141 = vmatpush1.bf16.msra.mxu0 0
    %142 = vmatprep.subr.bf16.mxu0 0
    %143 = vmatpush1.bf16.msra.mxu0 0
    %144 = vmatprep.subr.bf16.mxu0 0
    %145 = vmatpush1.bf16.msra.mxu0 0
    %146 = vmatprep.subr.bf16.mxu0 0
    %147 = vmatpush1.bf16.msra.mxu0 0
    %148 = vmatprep.subr.bf16.mxu0 0
    %149 = vmatpush1.bf16.msra.mxu0 0
    %150 = vmatprep.subr.bf16.mxu0 0
    %151 = vmatpush1.bf16.msra.mxu0 0
    %152 = vmatprep.subr.bf16.mxu0 0
    %153 = vmatpush1.bf16.msra.mxu0 0
    %154 = vmatprep.subr.bf16.mxu0 0
    %155 = vmatpush1.bf16.msra.mxu0 0
    %156 = vmatprep.subr.bf16.mxu0 0
    %157 = vmatpush1.bf16.msra.mxu0 0
    %158 = vmatprep.subr.bf16.mxu0 0
    %159 = vmatpush1.bf16.msra.mxu0 0
    %160 = vmatprep.mubr.bf16.mxu0 0
    %161 = vmatmul.mubr.bf16.gmra.mrb[0].mxu0 %v126
    %v162 = vpop.f32.mrb[0].mxu0
    %v163 = vadd.f32 0.0, %v162
    %v164 = vpop.f32.mrb[0].mxu0
    %v165 = vpop.f32.mrb[0].mxu0
    %v166 = vpop.f32.mrb[0].mxu0
    %167 = vdwg.mxu0
    %v168 = vadd.f32 %v122, %v163
    %v169 = vtanh.pop %v168
    %v170 = vpack.c.bf16 %v169, %v169
    %s171 = scalar_lea.vmem [#allocation4], 1
    %172 = vst.msk [vmem:[%s171] sm:$0x1] %vm118, %v170
    %s173 = scalar_lea.vmem %s0, 2
    %v174 = vld [vmem:[%s173] sm:$0x1]
    %v175 = vunpack.c.l.bf16 %v174
    %v176 = vld [vmem:[#allocation2] sm:$0xff]
    %v177 = vld [vmem:[#allocation2 + $0x8] sm:$0xff]
    %v179 = vsel %vm71, %v170, 0
    %181 = vmatprep.subr.bf16.mxu0 0
    %182 = vmatpush1.bf16.msra.mxu0 %v176
    %183 = vmatprep.subr.bf16.mxu0 0
    %184 = vmatpush1.bf16.msra.mxu0 %v177
    %185 = vmatprep.subr.bf16.mxu0 0
    %186 = vmatpush1.bf16.msra.mxu0 0
    %187 = vmatprep.subr.bf16.mxu0 0
    %188 = vmatpush1.bf16.msra.mxu0 0
    %189 = vmatprep.subr.bf16.mxu0 0
    %190 = vmatpush1.bf16.msra.mxu0 0
    %191 = vmatprep.subr.bf16.mxu0 0
    %192 = vmatpush1.bf16.msra.mxu0 0
    %193 = vmatprep.subr.bf16.mxu0 0
    %194 = vmatpush1.bf16.msra.mxu0 0
    %195 = vmatprep.subr.bf16.mxu0 0
    %196 = vmatpush1.bf16.msra.mxu0 0
    %197 = vmatprep.subr.bf16.mxu0 0
    %198 = vmatpush1.bf16.msra.mxu0 0
    %199 = vmatprep.subr.bf16.mxu0 0
    %200 = vmatpush1.bf16.msra.mxu0 0
    %201 = vmatprep.subr.bf16.mxu0 0
    %202 = vmatpush1.bf16.msra.mxu0 0
    %203 = vmatprep.subr.bf16.mxu0 0
    %204 = vmatpush1.bf16.msra.mxu0 0
    %205 = vmatprep.subr.bf16.mxu0 0
    %206 = vmatpush1.bf16.msra.mxu0 0
    %207 = vmatprep.subr.bf16.mxu0 0
    %208 = vmatpush1.bf16.msra.mxu0 0
    %209 = vmatprep.subr.bf16.mxu0 0
    %210 = vmatpush1.bf16.msra.mxu0 0
    %211 = vmatprep.subr.bf16.mxu0 0
    %212 = vmatpush1.bf16.msra.mxu0 0
    %213 = vmatprep.mubr.bf16.mxu0 0
    %214 = vmatmul.mubr.bf16.gmra.mrb[0].mxu0 %v179
    %v215 = vpop.f32.mrb[0].mxu0
    %v216 = vadd.f32 0.0, %v215
    %v217 = vpop.f32.mrb[0].mxu0
    %v218 = vpop.f32.mrb[0].mxu0
    %v219 = vpop.f32.mrb[0].mxu0
    %220 = vdwg.mxu0
    %v221 = vadd.f32 %v175, %v216
    %v222 = vtanh.pop %v221
    %v223 = vpack.c.bf16 %v222, %v222
    %s224 = scalar_lea.vmem [#allocation4], 2
    %225 = vst.msk [vmem:[%s224] sm:$0x1] %vm118, %v223
    %s226 = scalar_lea.vmem %s0, 3
    %v227 = vld [vmem:[%s226] sm:$0x1]
    %v228 = vunpack.c.l.bf16 %v227
    %v229 = vld [vmem:[#allocation2] sm:$0xff]
    %v230 = vld [vmem:[#allocation2 + $0x8] sm:$0xff]
    %v232 = vsel %vm71, %v223, 0
    %234 = vmatprep.subr.bf16.mxu0 0
    %235 = vmatpush1.bf16.msra.mxu0 %v229
    %236 = vmatprep.subr.bf16.mxu0 0
    %237 = vmatpush1.bf16.msra.mxu0 %v230
    %238 = vmatprep.subr.bf16.mxu0 0
    %239 = vmatpush1.bf16.msra.mxu0 0
    %240 = vmatprep.subr.bf16.mxu0 0
    %241 = vmatpush1.bf16.msra.mxu0 0
    %242 = vmatprep.subr.bf16.mxu0 0
    %243 = vmatpush1.bf16.msra.mxu0 0
    %244 = vmatprep.subr.bf16.mxu0 0
    %245 = vmatpush1.bf16.msra.mxu0 0
    %246 = vmatprep.subr.bf16.mxu0 0
    %247 = vmatpush1.bf16.msra.mxu0 0
    %248 = vmatprep.subr.bf16.mxu0 0
    %249 = vmatpush1.bf16.msra.mxu0 0
    %250 = vmatprep.subr.bf16.mxu0 0
    %251 = vmatpush1.bf16.msra.mxu0 0
    %252 = vmatprep.subr.bf16.mxu0 0
    %253 = vmatpush1.bf16.msra.mxu0 0
    %254 = vmatprep.subr.bf16.mxu0 0
    %255 = vmatpush1.bf16.msra.mxu0 0
    %256 = vmatprep.subr.bf16.mxu0 0
    %257 = vmatpush1.bf16.msra.mxu0 0
    %258 = vmatprep.subr.bf16.mxu0 0
    %259 = vmatpush1.bf16.msra.mxu0 0
    %260 = vmatprep.subr.bf16.mxu0 0
    %261 = vmatpush1.bf16.msra.mxu0 0
    %262 = vmatprep.subr.bf16.mxu0 0
    %263 = vmatpush1.bf16.msra.mxu0 0
    %264 = vmatprep.subr.bf16.mxu0 0
    %265 = vmatpush1.bf16.msra.mxu0 0
    %266 = vmatprep.mubr.bf16.mxu0 0
    %267 = vmatmul.mubr.bf16.gmra.mrb[0].mxu0 %v232
    %v268 = vpop.f32.mrb[0].mxu0
    %v269 = vadd.f32 0.0, %v268
    %v270 = vpop.f32.mrb[0].mxu0
    %v271 = vpop.f32.mrb[0].mxu0
    %v272 = vpop.f32.mrb[0].mxu0
    %273 = vdwg.mxu0
    %v274 = vadd.f32 %v228, %v269
    %v275 = vtanh.pop %v274
    %v276 = vpack.c.bf16 %v275, %v275
    %s277 = scalar_lea.vmem [#allocation4], 3
    %278 = vst.msk [vmem:[%s277] sm:$0x1] %vm118, %v276
    %s279 = scalar_lea.vmem %s0, 4
    %v280 = vld [vmem:[%s279] sm:$0x1]
    %v281 = vunpack.c.l.bf16 %v280
    %v282 = vld [vmem:[#allocation2] sm:$0xff]
    %v283 = vld [vmem:[#allocation2 + $0x8] sm:$0xff]
    %v285 = vsel %vm71, %v276, 0
    %287 = vmatprep.subr.bf16.mxu0 0
    %288 = vmatpush1.bf16.msra.mxu0 %v282
    %289 = vmatprep.subr.bf16.mxu0 0
    %290 = vmatpush1.bf16.msra.mxu0 %v283
    %291 = vmatprep.subr.bf16.mxu0 0
    %292 = vmatpush1.bf16.msra.mxu0 0
    %293 = vmatprep.subr.bf16.mxu0 0
    %294 = vmatpush1.bf16.msra.mxu0 0
    %295 = vmatprep.subr.bf16.mxu0 0
    %296 = vmatpush1.bf16.msra.mxu0 0
    %297 = vmatprep.subr.bf16.mxu0 0
    %298 = vmatpush1.bf16.msra.mxu0 0
    %299 = vmatprep.subr.bf16.mxu0 0
    %300 = vmatpush1.bf16.msra.mxu0 0
    %301 = vmatprep.subr.bf16.mxu0 0
    %302 = vmatpush1.bf16.msra.mxu0 0
    %303 = vmatprep.subr.bf16.mxu0 0
    %304 = vmatpush1.bf16.msra.mxu0 0
    %305 = vmatprep.subr.bf16.mxu0 0
    %306 = vmatpush1.bf16.msra.mxu0 0
    %307 = vmatprep.subr.bf16.mxu0 0
    %308 = vmatpush1.bf16.msra.mxu0 0
    %309 = vmatprep.subr.bf16.mxu0 0
    %310 = vmatpush1.bf16.msra.mxu0 0
    %311 = vmatprep.subr.bf16.mxu0 0
    %312 = vmatpush1.bf16.msra.mxu0 0
    %313 = vmatprep.subr.bf16.mxu0 0
    %314 = vmatpush1.bf16.msra.mxu0 0
    %315 = vmatprep.subr.bf16.mxu0 0
    %316 = vmatpush1.bf16.msra.mxu0 0
    %317 = vmatprep.subr.bf16.mxu0 0
    %318 = vmatpush1.bf16.msra.mxu0 0
    %319 = vmatprep.mubr.bf16.mxu0 0
    %320 = vmatmul.mubr.bf16.gmra.mrb[0].mxu0 %v285
    %v321 = vpop.f32.mrb[0].mxu0
    %v322 = vadd.f32 0.0, %v321
    %v323 = vpop.f32.mrb[0].mxu0
    %v324 = vpop.f32.mrb[0].mxu0
    %v325 = vpop.f32.mrb[0].mxu0
    %326 = vdwg.mxu0
    %v327 = vadd.f32 %v281, %v322
    %v328 = vtanh.pop %v327
    %v329 = vpack.c.bf16 %v328, %v328
    %s330 = scalar_lea.vmem [#allocation4], 4
    %331 = vst.msk [vmem:[%s330] sm:$0x1] %vm118, %v329
    %s332 = scalar_lea.vmem %s0, 5
    %v333 = vld [vmem:[%s332] sm:$0x1]
    %v334 = vunpack.c.l.bf16 %v333
    %v335 = vld [vmem:[#allocation2] sm:$0xff]
    %v336 = vld [vmem:[#allocation2 + $0x8] sm:$0xff]
    %v338 = vsel %vm71, %v329, 0
    %340 = vmatprep.subr.bf16.mxu0 0
    %341 = vmatpush1.bf16.msra.mxu0 %v335
    %342 = vmatprep.subr.bf16.mxu0 0
    %343 = vmatpush1.bf16.msra.mxu0 %v336
    %344 = vmatprep.subr.bf16.mxu0 0
    %345 = vmatpush1.bf16.msra.mxu0 0
    %346 = vmatprep.subr.bf16.mxu0 0
    %347 = vmatpush1.bf16.msra.mxu0 0
    %348 = vmatprep.subr.bf16.mxu0 0
    %349 = vmatpush1.bf16.msra.mxu0 0
    %350 = vmatprep.subr.bf16.mxu0 0
    %351 = vmatpush1.bf16.msra.mxu0 0
    %352 = vmatprep.subr.bf16.mxu0 0
    %353 = vmatpush1.bf16.msra.mxu0 0
    %354 = vmatprep.subr.bf16.mxu0 0
    %355 = vmatpush1.bf16.msra.mxu0 0
    %356 = vmatprep.subr.bf16.mxu0 0
    %357 = vmatpush1.bf16.msra.mxu0 0
    %358 = vmatprep.subr.bf16.mxu0 0
    %359 = vmatpush1.bf16.msra.mxu0 0
    %360 = vmatprep.subr.bf16.mxu0 0
    %361 = vmatpush1.bf16.msra.mxu0 0
    %362 = vmatprep.subr.bf16.mxu0 0
    %363 = vmatpush1.bf16.msra.mxu0 0
    %364 = vmatprep.subr.bf16.mxu0 0
    %365 = vmatpush1.bf16.msra.mxu0 0
    %366 = vmatprep.subr.bf16.mxu0 0
    %367 = vmatpush1.bf16.msra.mxu0 0
    %368 = vmatprep.subr.bf16.mxu0 0
    %369 = vmatpush1.bf16.msra.mxu0 0
    %370 = vmatprep.subr.bf16.mxu0 0
    %371 = vmatpush1.bf16.msra.mxu0 0
    %372 = vmatprep.mubr.bf16.mxu0 0
    %373 = vmatmul.mubr.bf16.gmra.mrb[0].mxu0 %v338
    %v374 = vpop.f32.mrb[0].mxu0
    %v375 = vadd.f32 0.0, %v374
    %v376 = vpop.f32.mrb[0].mxu0
    %v377 = vpop.f32.mrb[0].mxu0
    %v378 = vpop.f32.mrb[0].mxu0
    %379 = vdwg.mxu0
    %v380 = vadd.f32 %v334, %v375
    %v381 = vtanh.pop %v380
    %v382 = vpack.c.bf16 %v381, %v381
    %s383 = scalar_lea.vmem [#allocation4], 5
    %384 = vst.msk [vmem:[%s383] sm:$0x1] %vm118, %v382
    %s385 = scalar_lea.vmem %s0, 6
    %v386 = vld [vmem:[%s385] sm:$0x1]
    %v387 = vunpack.c.l.bf16 %v386
    %v388 = vld [vmem:[#allocation2] sm:$0xff]
    %v389 = vld [vmem:[#allocation2 + $0x8] sm:$0xff]
    %v391 = vsel %vm71, %v382, 0
    %393 = vmatprep.subr.bf16.mxu0 0
    %394 = vmatpush1.bf16.msra.mxu0 %v388
    %395 = vmatprep.subr.bf16.mxu0 0
    %396 = vmatpush1.bf16.msra.mxu0 %v389
    %397 = vmatprep.subr.bf16.mxu0 0
    %398 = vmatpush1.bf16.msra.mxu0 0
    %399 = vmatprep.subr.bf16.mxu0 0
    %400 = vmatpush1.bf16.msra.mxu0 0
    %401 = vmatprep.subr.bf16.mxu0 0
    %402 = vmatpush1.bf16.msra.mxu0 0
    %403 = vmatprep.subr.bf16.mxu0 0
    %404 = vmatpush1.bf16.msra.mxu0 0
    %405 = vmatprep.subr.bf16.mxu0 0
    %406 = vmatpush1.bf16.msra.mxu0 0
    %407 = vmatprep.subr.bf16.mxu0 0
    %408 = vmatpush1.bf16.msra.mxu0 0
    %409 = vmatprep.subr.bf16.mxu0 0
    %410 = vmatpush1.bf16.msra.mxu0 0
    %411 = vmatprep.subr.bf16.mxu0 0
    %412 = vmatpush1.bf16.msra.mxu0 0
    %413 = vmatprep.subr.bf16.mxu0 0
    %414 = vmatpush1.bf16.msra.mxu0 0
    %415 = vmatprep.subr.bf16.mxu0 0
    %416 = vmatpush1.bf16.msra.mxu0 0
    %417 = vmatprep.subr.bf16.mxu0 0
    %418 = vmatpush1.bf16.msra.mxu0 0
    %419 = vmatprep.subr.bf16.mxu0 0
    %420 = vmatpush1.bf16.msra.mxu0 0
    %421 = vmatprep.subr.bf16.mxu0 0
    %422 = vmatpush1.bf16.msra.mxu0 0
    %423 = vmatprep.subr.bf16.mxu0 0
    %424 = vmatpush1.bf16.msra.mxu0 0
    %425 = vmatprep.mubr.bf16.mxu0 0
    %426 = vmatmul.mubr.bf16.gmra.mrb[0].mxu0 %v391
    %v427 = vpop.f32.mrb[0].mxu0
    %v428 = vadd.f32 0.0, %v427
    %v429 = vpop.f32.mrb[0].mxu0
    %v430 = vpop.f32.mrb[0].mxu0
    %v431 = vpop.f32.mrb[0].mxu0
    %432 = vdwg.mxu0
    %v433 = vadd.f32 %v387, %v428
    %v434 = vtanh.pop %v433
    %v435 = vpack.c.bf16 %v434, %v434
    %s436 = scalar_lea.vmem [#allocation4], 6
    %437 = vst.msk [vmem:[%s436] sm:$0x1] %vm118, %v435
    %s438 = scalar_lea.vmem %s0, 7
    %v439 = vld [vmem:[%s438] sm:$0x1]
    %v440 = vunpack.c.l.bf16 %v439
    %v441 = vld [vmem:[#allocation2] sm:$0xff]
    %v442 = vld [vmem:[#allocation2 + $0x8] sm:$0xff]
    %v444 = vsel %vm71, %v435, 0
    %446 = vmatprep.subr.bf16.mxu0 0
    %447 = vmatpush1.bf16.msra.mxu0 %v441
    %448 = vmatprep.subr.bf16.mxu0 0
    %449 = vmatpush1.bf16.msra.mxu0 %v442
    %450 = vmatprep.subr.bf16.mxu0 0
    %451 = vmatpush1.bf16.msra.mxu0 0
    %452 = vmatprep.subr.bf16.mxu0 0
    %453 = vmatpush1.bf16.msra.mxu0 0
    %454 = vmatprep.subr.bf16.mxu0 0
    %455 = vmatpush1.bf16.msra.mxu0 0
    %456 = vmatprep.subr.bf16.mxu0 0
    %457 = vmatpush1.bf16.msra.mxu0 0
    %458 = vmatprep.subr.bf16.mxu0 0
    %459 = vmatpush1.bf16.msra.mxu0 0
    %460 = vmatprep.subr.bf16.mxu0 0
    %461 = vmatpush1.bf16.msra.mxu0 0
    %462 = vmatprep.subr.bf16.mxu0 0
    %463 = vmatpush1.bf16.msra.mxu0 0
    %464 = vmatprep.subr.bf16.mxu0 0
    %465 = vmatpush1.bf16.msra.mxu0 0
    %466 = vmatprep.subr.bf16.mxu0 0
    %467 = vmatpush1.bf16.msra.mxu0 0
    %468 = vmatprep.subr.bf16.mxu0 0
    %469 = vmatpush1.bf16.msra.mxu0 0
    %470 = vmatprep.subr.bf16.mxu0 0
    %471 = vmatpush1.bf16.msra.mxu0 0
    %472 = vmatprep.subr.bf16.mxu0 0
    %473 = vmatpush1.bf16.msra.mxu0 0
    %474 = vmatprep.subr.bf16.mxu0 0
    %475 = vmatpush1.bf16.msra.mxu0 0
    %476 = vmatprep.subr.bf16.mxu0 0
    %477 = vmatpush1.bf16.msra.mxu0 0
    %478 = vmatprep.mubr.bf16.mxu0 0
    %479 = vmatmul.mubr.bf16.gmra.mrb[0].mxu0 %v444
    %v480 = vpop.f32.mrb[0].mxu0
    %v481 = vadd.f32 0.0, %v480
    %v482 = vpop.f32.mrb[0].mxu0
    %v483 = vpop.f32.mrb[0].mxu0
    %v484 = vpop.f32.mrb[0].mxu0
    %485 = vdwg.mxu0
    %v486 = vadd.f32 %v440, %v481
    %v487 = vtanh.pop %v486
    %v488 = vpack.c.bf16 %v487, %v487
    %s489 = scalar_lea.vmem [#allocation4], 7
    %490 = vst.msk [vmem:[%s489] sm:$0x1] %vm118, %v488
    %vm491 = vcmask 254976
    %492 = vst.msk [vmem:[#allocation3] sm:$0x3] %vm491, %v487
    // Predicated region
    $region45: #{rnn_language_model_forward.4} parent=1 // pred_check
      _
    $region46: #{rnn_language_model_forward.4} parent=1 // pred_check_branch
      %494 = sbr.rel (0) target = $region48
    $region47: #{rnn_language_model_forward.4} parent=1 // pred_region
      %s496 = ssub.s32 128, 128
      %497 = vsyncadd [#allocation5], %s496
      %s498 = sshll.u32 [#allocation4], 4
      %s499 = int_to_ptr.vmem [resolvable:$true] %s498
      %504 = dma.vmem_to_hbm [thread:$0]  %s499, 128, %s2, [#allocation5], 16, 16, 1
    $region48: #{rnn_language_model_forward.4} parent=1 // pred_fallthru
      _
    // Predicated region
    $region49: #{rnn_language_model_forward.4} parent=1 // pred_check
      _
    $region50: #{rnn_language_model_forward.4} parent=1 // pred_check_branch
      %506 = sbr.rel (0) target = $region52
    $region51: #{rnn_language_model_forward.4} parent=1 // pred_region
      %507 = dma.done [#allocation5], 128
    $region52: #{rnn_language_model_forward.4} parent=1 // pred_fallthru
      _
    %508 = vsyncpa [#allocation5], 1

// kernel: rnn_language_model_forward.3
$region0: #{rnn_language_model_forward.3}
  #allocation0 [shape = 'u32[]', space=smem, size = 0x4, offset = 0x4, fixed_abs, tag = 'smem constant byte address 0x4 - core index']
  #allocation1 [shape = 'u32[144,128]{1,0:T(1,128)}', space=vmem, size = 0x12000, scoped, tag = 'internal scratch']
  %s0 = inlined_call_operand.hbm [shape: f32[2,8,32], index: 0, kind: input, shape index: {}]
  %s1 = inlined_call_operand.hbm [shape: bf16[32,32], index: 1, kind: input, shape index: {}]
  %s2 = inlined_call_operand.hbm [shape: f32[1,32], index: 2, kind: input, shape index: {}]
  %s3 = inlined_call_operand.hbm [shape: bf16[8,2,32], index: 3, kind: output, shape index: {}]
  %s4 = sld [smem:[#allocation0]]
  $region34: #{rnn_language_model_forward.3} parent=0
    _
  %s6 = ssub.s32 1, %s4
  %s7 = scalar_select 0, %s6, %s4
  $region1: #{rnn_language_model_forward.3} parent=0
    #allocation2 [shape = 'u8[8192]{0}', space=vmem, size = 0x2000, scoped, tag = 'input window, operand 0, single buffered']
    #allocation3 [shape = 's32[1]{0}', space=sflag, size = 0x4, scoped, tag = 'scoped memory for rnn_language_model_forward.3']
    #allocation4 [shape = 's32[1]{0}', space=sflag, size = 0x4, scoped, tag = 'scoped memory for rnn_language_model_forward.3']
    #allocation5 [shape = 'u8[8192]{0}', space=vmem, size = 0x2000, scoped, tag = 'input window, operand 1, single buffered']
    #allocation6 [shape = 's32[1]{0}', space=sflag, size = 0x4, scoped, tag = 'scoped memory for rnn_language_model_forward.3']
    #allocation7 [shape = 'u8[512]{0}', space=vmem, size = 0x400, scoped, tag = 'input window, operand 2, single buffered']
    #allocation8 [shape = 'u8[4096]{0}', space=vmem, size = 0x1000, scoped, tag = 'output window, operand 0, single buffered']
    %8 = vsyncpa [#allocation3], 0
    %9 = vsyncpa [#allocation6], 0
    %10 = vsyncpa [#allocation4], 0
    // Predicated region
    $region2: #{rnn_language_model_forward.3} parent=1 // pred_check
      _
    $region3: #{rnn_language_model_forward.3} parent=1 // pred_check_branch
      %12 = sbr.rel (0) target = $region5
    $region4: #{rnn_language_model_forward.3} parent=1 // pred_region
      %s14 = ssub.s32 256, 256
      %15 = vsyncadd [#allocation3], %s14
      %s16 = sshll.u32 [#allocation2], 4
      %s17 = int_to_ptr.vmem [resolvable:$true] %s16
      %22 = dma.hbm_to_vmem [thread:$0]  %s0, 256, %s17, [#allocation3], 128, 128, 8
    $region5: #{rnn_language_model_forward.3} parent=1 // pred_fallthru
      _
    // Predicated region
    $region6: #{rnn_language_model_forward.3} parent=1 // pred_check
      _
    $region7: #{rnn_language_model_forward.3} parent=1 // pred_check_branch
      %24 = sbr.rel (0) target = $region9
    $region8: #{rnn_language_model_forward.3} parent=1 // pred_region
      %s26 = ssub.s32 256, 256
      %27 = vsyncadd [#allocation6], %s26
      %s28 = sshll.u32 [#allocation5], 4
      %s29 = int_to_ptr.vmem [resolvable:$true] %s28
      %34 = dma.hbm_to_vmem [thread:$0]  %s1, 256, %s29, [#allocation6], 64, 64, 4
    $region9: #{rnn_language_model_forward.3} parent=1 // pred_fallthru
      _
    // Predicated region
    $region10: #{rnn_language_model_forward.3} parent=1 // pred_check
      _
    $region11: #{rnn_language_model_forward.3} parent=1 // pred_check_branch
      %36 = sbr.rel (0) target = $region13
    $region12: #{rnn_language_model_forward.3} parent=1 // pred_region
      %s38 = ssub.s32 16, 16
      %39 = vsyncadd [#allocation6], %s38
      %s41 = sshll.u32 [#allocation7], 4
      %s42 = int_to_ptr.vmem [resolvable:$true] %s41
      %44 = dma.hbm_to_vmem [thread:$0]  %s2, 16, %s42, [#allocation6]
    $region13: #{rnn_language_model_forward.3} parent=1 // pred_fallthru
      _
    // Predicated region
    $region14: #{rnn_language_model_forward.3} parent=1 // pred_check
      _
    $region15: #{rnn_language_model_forward.3} parent=1 // pred_check_branch
      %46 = sbr.rel (0) target = $region17
    $region16: #{rnn_language_model_forward.3} parent=1 // pred_region
      %47 = dma.done [#allocation3], 256
    $region17: #{rnn_language_model_forward.3} parent=1 // pred_fallthru
      _
    // Predicated region
    $region18: #{rnn_language_model_forward.3} parent=1 // pred_check
      _
    $region19: #{rnn_language_model_forward.3} parent=1 // pred_check_branch
      %49 = sbr.rel (0) target = $region21
    $region20: #{rnn_language_model_forward.3} parent=1 // pred_region
      %50 = dma.done [#allocation6], 256
    $region21: #{rnn_language_model_forward.3} parent=1 // pred_fallthru
      _
    // Predicated region
    $region22: #{rnn_language_model_forward.3} parent=1 // pred_check
      _
    $region23: #{rnn_language_model_forward.3} parent=1 // pred_check_branch
      %52 = sbr.rel (0) target = $region25
    $region24: #{rnn_language_model_forward.3} parent=1 // pred_region
      %53 = dma.done [#allocation6], 16
    $region25: #{rnn_language_model_forward.3} parent=1 // pred_fallthru
      _
    %v55 = vld [vmem:[#allocation2] sm:$0x1]
    %v56 = vld [vmem:[#allocation2 + $0x8] sm:$0x1]
    %v57 = vpack.c.bf16 %v55, %v55
    %v58 = vpack.c.bf16 %v56, %v56
    %v59 = vld [vmem:[#allocation5] sm:$0xf]
    %v60 = vld [vmem:[#allocation5 + $0x4] sm:$0xf]
    %v61 = vld [vmem:[#allocation5 + $0x8] sm:$0xf]
    %v62 = vld [vmem:[#allocation5 + $0xc] sm:$0xf]
    %v63 = vld [vmem:[#allocation7] sm:$0x1]
    %v65 = vlaneseq
    %v66 = vshrl.u32 %v65, 7
    %v67 = vsub.s32 0, %v66
    %v68 = vrot.slane %v63, %v67
    %v72 = vunpack.c.l.b16 %v57
    %v73 = vunpack.c.l.b16 %v58
    %v74 = vrot.slane %v73, 7
    %vm75 = vcmask 1041409
    %v76 = vsel %vm75, %v74, %v72
    %v77 = vpack.c.b16 %v76, %v76
    %v82 = vunpack.c.l.b16 %v59
    %v83 = vunpack.c.l.b16 %v60
    %v84 = vunpack.c.l.b16 %v61
    %v85 = vunpack.c.l.b16 %v62
    %v86 = vpack.c.b16 %v83, %v82
    %v87 = vpack.c.b16 %v85, %v84
    %vm90 = vcmask 261120
    %v92 = vsel %vm90, %v77, 0
    %94 = vmatprep.subr.bf16.mxu0 0
    %95 = vmatpush1.bf16.msra.mxu0 %v86
    %96 = vmatprep.subr.bf16.mxu0 0
    %97 = vmatpush1.bf16.msra.mxu0 %v87
    %98 = vmatprep.subr.bf16.mxu0 0
    %99 = vmatpush1.bf16.msra.mxu0 0
    %100 = vmatprep.subr.bf16.mxu0 0
    %101 = vmatpush1.bf16.msra.mxu0 0
    %102 = vmatprep.subr.bf16.mxu0 0
    %103 = vmatpush1.bf16.msra.mxu0 0
    %104 = vmatprep.subr.bf16.mxu0 0
    %105 = vmatpush1.bf16.msra.mxu0 0
    %106 = vmatprep.subr.bf16.mxu0 0
    %107 = vmatpush1.bf16.msra.mxu0 0
    %108 = vmatprep.subr.bf16.mxu0 0
    %109 = vmatpush1.bf16.msra.mxu0 0
    %110 = vmatprep.subr.bf16.mxu0 0
    %111 = vmatpush1.bf16.msra.mxu0 0
    %112 = vmatprep.subr.bf16.mxu0 0
    %113 = vmatpush1.bf16.msra.mxu0 0
    %114 = vmatprep.subr.bf16.mxu0 0
    %115 = vmatpush1.bf16.msra.mxu0 0
    %116 = vmatprep.subr.bf16.mxu0 0
    %117 = vmatpush1.bf16.msra.mxu0 0
    %118 = vmatprep.subr.bf16.mxu0 0
    %119 = vmatpush1.bf16.msra.mxu0 0
    %120 = vmatprep.subr.bf16.mxu0 0
    %121 = vmatpush1.bf16.msra.mxu0 0
    %122 = vmatprep.subr.bf16.mxu0 0
    %123 = vmatpush1.bf16.msra.mxu0 0
    %124 = vmatprep.subr.bf16.mxu0 0
    %125 = vmatpush1.bf16.msra.mxu0 0
    %126 = vmatprep.mubr.bf16.mxu0 0
    %127 = vmatmul.mubr.bf16.gmra.mrb[0].mxu0 %v92
    %v128 = vpop.f32.mrb[0].mxu0
    %v129 = vadd.f32 %v68, %v128
    %v130 = vpop.f32.mrb[0].mxu0
    %v131 = vpop.f32.mrb[0].mxu0
    %v132 = vpop.f32.mrb[0].mxu0
    %133 = vdwg.mxu0
    %v134 = vpack.c.bf16 %v129, %v129
    %vm135 = vcmask 253952
    %136 = vst.msk [vmem:[#allocation8] sm:$0x1] %vm135, %v134
    %v137 = vld [vmem:[#allocation2 + $0x1] sm:$0x1]
    %v138 = vld [vmem:[#allocation2 + $0x9] sm:$0x1]
    %v139 = vpack.c.bf16 %v137, %v137
    %v140 = vpack.c.bf16 %v138, %v138
    %v141 = vld [vmem:[#allocation5] sm:$0xf]
    %v142 = vld [vmem:[#allocation5 + $0x4] sm:$0xf]
    %v143 = vld [vmem:[#allocation5 + $0x8] sm:$0xf]
    %v144 = vld [vmem:[#allocation5 + $0xc] sm:$0xf]
    %v145 = vld [vmem:[#allocation7] sm:$0x1]
    %v147 = vlaneseq
    %v148 = vshrl.u32 %v147, 7
    %v149 = vsub.s32 0, %v148
    %v150 = vrot.slane %v145, %v149
    %v154 = vunpack.c.l.b16 %v139
    %v155 = vunpack.c.l.b16 %v140
    %v156 = vrot.slane %v155, 7
    %v157 = vsel %vm75, %v156, %v154
    %v158 = vpack.c.b16 %v157, %v157
    %v163 = vunpack.c.l.b16 %v141
    %v164 = vunpack.c.l.b16 %v142
    %v165 = vunpack.c.l.b16 %v143
    %v166 = vunpack.c.l.b16 %v144
    %v167 = vpack.c.b16 %v164, %v163
    %v168 = vpack.c.b16 %v166, %v165
    %v172 = vsel %vm90, %v158, 0
    %174 = vmatprep.subr.bf16.mxu0 0
    %175 = vmatpush1.bf16.msra.mxu0 %v167
    %176 = vmatprep.subr.bf16.mxu0 0
    %177 = vmatpush1.bf16.msra.mxu0 %v168
    %178 = vmatprep.subr.bf16.mxu0 0
    %179 = vmatpush1.bf16.msra.mxu0 0
    %180 = vmatprep.subr.bf16.mxu0 0
    %181 = vmatpush1.bf16.msra.mxu0 0
    %182 = vmatprep.subr.bf16.mxu0 0
    %183 = vmatpush1.bf16.msra.mxu0 0
    %184 = vmatprep.subr.bf16.mxu0 0
    %185 = vmatpush1.bf16.msra.mxu0 0
    %186 = vmatprep.subr.bf16.mxu0 0
    %187 = vmatpush1.bf16.msra.mxu0 0
    %188 = vmatprep.subr.bf16.mxu0 0
    %189 = vmatpush1.bf16.msra.mxu0 0
    %190 = vmatprep.subr.bf16.mxu0 0
    %191 = vmatpush1.bf16.msra.mxu0 0
    %192 = vmatprep.subr.bf16.mxu0 0
    %193 = vmatpush1.bf16.msra.mxu0 0
    %194 = vmatprep.subr.bf16.mxu0 0
    %195 = vmatpush1.bf16.msra.mxu0 0
    %196 = vmatprep.subr.bf16.mxu0 0
    %197 = vmatpush1.bf16.msra.mxu0 0
    %198 = vmatprep.subr.bf16.mxu0 0
    %199 = vmatpush1.bf16.msra.mxu0 0
    %200 = vmatprep.subr.bf16.mxu0 0
    %201 = vmatpush1.bf16.msra.mxu0 0
    %202 = vmatprep.subr.bf16.mxu0 0
    %203 = vmatpush1.bf16.msra.mxu0 0
    %204 = vmatprep.subr.bf16.mxu0 0
    %205 = vmatpush1.bf16.msra.mxu0 0
    %206 = vmatprep.mubr.bf16.mxu0 0
    %207 = vmatmul.mubr.bf16.gmra.mrb[0].mxu0 %v172
    %v208 = vpop.f32.mrb[0].mxu0
    %v209 = vadd.f32 %v150, %v208
    %v210 = vpop.f32.mrb[0].mxu0
    %v211 = vpop.f32.mrb[0].mxu0
    %v212 = vpop.f32.mrb[0].mxu0
    %213 = vdwg.mxu0
    %v214 = vpack.c.bf16 %v209, %v209
    %s215 = scalar_lea.vmem [#allocation8], 1
    %216 = vst.msk [vmem:[%s215] sm:$0x1] %vm135, %v214
    %v217 = vld [vmem:[#allocation2 + $0x2] sm:$0x1]
    %v218 = vld [vmem:[#allocation2 + $0xa] sm:$0x1]
    %v219 = vpack.c.bf16 %v217, %v217
    %v220 = vpack.c.bf16 %v218, %v218
    %v221 = vld [vmem:[#allocation5] sm:$0xf]
    %v222 = vld [vmem:[#allocation5 + $0x4] sm:$0xf]
    %v223 = vld [vmem:[#allocation5 + $0x8] sm:$0xf]
    %v224 = vld [vmem:[#allocation5 + $0xc] sm:$0xf]
    %v225 = vld [vmem:[#allocation7] sm:$0x1]
    %v227 = vlaneseq
    %v228 = vshrl.u32 %v227, 7
    %v229 = vsub.s32 0, %v228
    %v230 = vrot.slane %v225, %v229
    %v234 = vunpack.c.l.b16 %v219
    %v235 = vunpack.c.l.b16 %v220
    %v236 = vrot.slane %v235, 7
    %v237 = vsel %vm75, %v236, %v234
    %v238 = vpack.c.b16 %v237, %v237
    %v243 = vunpack.c.l.b16 %v221
    %v244 = vunpack.c.l.b16 %v222
    %v245 = vunpack.c.l.b16 %v223
    %v246 = vunpack.c.l.b16 %v224
    %v247 = vpack.c.b16 %v244, %v243
    %v248 = vpack.c.b16 %v246, %v245
    %v252 = vsel %vm90, %v238, 0
    %254 = vmatprep.subr.bf16.mxu0 0
    %255 = vmatpush1.bf16.msra.mxu0 %v247
    %256 = vmatprep.subr.bf16.mxu0 0
    %257 = vmatpush1.bf16.msra.mxu0 %v248
    %258 = vmatprep.subr.bf16.mxu0 0
    %259 = vmatpush1.bf16.msra.mxu0 0
    %260 = vmatprep.subr.bf16.mxu0 0
    %261 = vmatpush1.bf16.msra.mxu0 0
    %262 = vmatprep.subr.bf16.mxu0 0
    %263 = vmatpush1.bf16.msra.mxu0 0
    %264 = vmatprep.subr.bf16.mxu0 0
    %265 = vmatpush1.bf16.msra.mxu0 0
    %266 = vmatprep.subr.bf16.mxu0 0
    %267 = vmatpush1.bf16.msra.mxu0 0
    %268 = vmatprep.subr.bf16.mxu0 0
    %269 = vmatpush1.bf16.msra.mxu0 0
    %270 = vmatprep.subr.bf16.mxu0 0
    %271 = vmatpush1.bf16.msra.mxu0 0
    %272 = vmatprep.subr.bf16.mxu0 0
    %273 = vmatpush1.bf16.msra.mxu0 0
    %274 = vmatprep.subr.bf16.mxu0 0
    %275 = vmatpush1.bf16.msra.mxu0 0
    %276 = vmatprep.subr.bf16.mxu0 0
    %277 = vmatpush1.bf16.msra.mxu0 0
    %278 = vmatprep.subr.bf16.mxu0 0
    %279 = vmatpush1.bf16.msra.mxu0 0
    %280 = vmatprep.subr.bf16.mxu0 0
    %281 = vmatpush1.bf16.msra.mxu0 0
    %282 = vmatprep.subr.bf16.mxu0 0
    %283 = vmatpush1.bf16.msra.mxu0 0
    %284 = vmatprep.subr.bf16.mxu0 0
    %285 = vmatpush1.bf16.msra.mxu0 0
    %286 = vmatprep.mubr.bf16.mxu0 0
    %287 = vmatmul.mubr.bf16.gmra.mrb[0].mxu0 %v252
    %v288 = vpop.f32.mrb[0].mxu0
    %v289 = vadd.f32 %v230, %v288
    %v290 = vpop.f32.mrb[0].mxu0
    %v291 = vpop.f32.mrb[0].mxu0
    %v292 = vpop.f32.mrb[0].mxu0
    %293 = vdwg.mxu0
    %v294 = vpack.c.bf16 %v289, %v289
    %s295 = scalar_lea.vmem [#allocation8], 2
    %296 = vst.msk [vmem:[%s295] sm:$0x1] %vm135, %v294
    %v297 = vld [vmem:[#allocation2 + $0x3] sm:$0x1]
    %v298 = vld [vmem:[#allocation2 + $0xb] sm:$0x1]
    %v299 = vpack.c.bf16 %v297, %v297
    %v300 = vpack.c.bf16 %v298, %v298
    %v301 = vld [vmem:[#allocation5] sm:$0xf]
    %v302 = vld [vmem:[#allocation5 + $0x4] sm:$0xf]
    %v303 = vld [vmem:[#allocation5 + $0x8] sm:$0xf]
    %v304 = vld [vmem:[#allocation5 + $0xc] sm:$0xf]
    %v305 = vld [vmem:[#allocation7] sm:$0x1]
    %v307 = vlaneseq
    %v308 = vshrl.u32 %v307, 7
    %v309 = vsub.s32 0, %v308
    %v310 = vrot.slane %v305, %v309
    %v314 = vunpack.c.l.b16 %v299
    %v315 = vunpack.c.l.b16 %v300
    %v316 = vrot.slane %v315, 7
    %v317 = vsel %vm75, %v316, %v314
    %v318 = vpack.c.b16 %v317, %v317
    %v323 = vunpack.c.l.b16 %v301
    %v324 = vunpack.c.l.b16 %v302
    %v325 = vunpack.c.l.b16 %v303
    %v326 = vunpack.c.l.b16 %v304
    %v327 = vpack.c.b16 %v324, %v323
    %v328 = vpack.c.b16 %v326, %v325
    %v332 = vsel %vm90, %v318, 0
    %334 = vmatprep.subr.bf16.mxu0 0
    %335 = vmatpush1.bf16.msra.mxu0 %v327
    %336 = vmatprep.subr.bf16.mxu0 0
    %337 = vmatpush1.bf16.msra.mxu0 %v328
    %338 = vmatprep.subr.bf16.mxu0 0
    %339 = vmatpush1.bf16.msra.mxu0 0
    %340 = vmatprep.subr.bf16.mxu0 0
    %341 = vmatpush1.bf16.msra.mxu0 0
    %342 = vmatprep.subr.bf16.mxu0 0
    %343 = vmatpush1.bf16.msra.mxu0 0
    %344 = vmatprep.subr.bf16.mxu0 0
    %345 = vmatpush1.bf16.msra.mxu0 0
    %346 = vmatprep.subr.bf16.mxu0 0
    %347 = vmatpush1.bf16.msra.mxu0 0
    %348 = vmatprep.subr.bf16.mxu0 0
    %349 = vmatpush1.bf16.msra.mxu0 0
    %350 = vmatprep.subr.bf16.mxu0 0
    %351 = vmatpush1.bf16.msra.mxu0 0
    %352 = vmatprep.subr.bf16.mxu0 0
    %353 = vmatpush1.bf16.msra.mxu0 0
    %354 = vmatprep.subr.bf16.mxu0 0
    %355 = vmatpush1.bf16.msra.mxu0 0
    %356 = vmatprep.subr.bf16.mxu0 0
    %357 = vmatpush1.bf16.msra.mxu0 0
    %358 = vmatprep.subr.bf16.mxu0 0
    %359 = vmatpush1.bf16.msra.mxu0 0
    %360 = vmatprep.subr.bf16.mxu0 0
    %361 = vmatpush1.bf16.msra.mxu0 0
    %362 = vmatprep.subr.bf16.mxu0 0
    %363 = vmatpush1.bf16.msra.mxu0 0
    %364 = vmatprep.subr.bf16.mxu0 0
    %365 = vmatpush1.bf16.msra.mxu0 0
    %366 = vmatprep.mubr.bf16.mxu0 0
    %367 = vmatmul.mubr.bf16.gmra.mrb[0].mxu0 %v332
    %v368 = vpop.f32.mrb[0].mxu0
    %v369 = vadd.f32 %v310, %v368
    %v370 = vpop.f32.mrb[0].mxu0
    %v371 = vpop.f32.mrb[0].mxu0
    %v372 = vpop.f32.mrb[0].mxu0
    %373 = vdwg.mxu0
    %v374 = vpack.c.bf16 %v369, %v369
    %s375 = scalar_lea.vmem [#allocation8], 3
    %376 = vst.msk [vmem:[%s375] sm:$0x1] %vm135, %v374
    %v377 = vld [vmem:[#allocation2 + $0x4] sm:$0x1]
    %v378 = vld [vmem:[#allocation2 + $0xc] sm:$0x1]
    %v379 = vpack.c.bf16 %v377, %v377
    %v380 = vpack.c.bf16 %v378, %v378
    %v381 = vld [vmem:[#allocation5] sm:$0xf]
    %v382 = vld [vmem:[#allocation5 + $0x4] sm:$0xf]
    %v383 = vld [vmem:[#allocation5 + $0x8] sm:$0xf]
    %v384 = vld [vmem:[#allocation5 + $0xc] sm:$0xf]
    %v385 = vld [vmem:[#allocation7] sm:$0x1]
    %v387 = vlaneseq
    %v388 = vshrl.u32 %v387, 7
    %v389 = vsub.s32 0, %v388
    %v390 = vrot.slane %v385, %v389
    %v394 = vunpack.c.l.b16 %v379
    %v395 = vunpack.c.l.b16 %v380
    %v396 = vrot.slane %v395, 7
    %v397 = vsel %vm75, %v396, %v394
    %v398 = vpack.c.b16 %v397, %v397
    %v403 = vunpack.c.l.b16 %v381
    %v404 = vunpack.c.l.b16 %v382
    %v405 = vunpack.c.l.b16 %v383
    %v406 = vunpack.c.l.b16 %v384
    %v407 = vpack.c.b16 %v404, %v403
    %v408 = vpack.c.b16 %v406, %v405
    %v412 = vsel %vm90, %v398, 0
    %414 = vmatprep.subr.bf16.mxu0 0
    %415 = vmatpush1.bf16.msra.mxu0 %v407
    %416 = vmatprep.subr.bf16.mxu0 0
    %417 = vmatpush1.bf16.msra.mxu0 %v408
    %418 = vmatprep.subr.bf16.mxu0 0
    %419 = vmatpush1.bf16.msra.mxu0 0
    %420 = vmatprep.subr.bf16.mxu0 0
    %421 = vmatpush1.bf16.msra.mxu0 0
    %422 = vmatprep.subr.bf16.mxu0 0
    %423 = vmatpush1.bf16.msra.mxu0 0
    %424 = vmatprep.subr.bf16.mxu0 0
    %425 = vmatpush1.bf16.msra.mxu0 0
    %426 = vmatprep.subr.bf16.mxu0 0
    %427 = vmatpush1.bf16.msra.mxu0 0
    %428 = vmatprep.subr.bf16.mxu0 0
    %429 = vmatpush1.bf16.msra.mxu0 0
    %430 = vmatprep.subr.bf16.mxu0 0
    %431 = vmatpush1.bf16.msra.mxu0 0
    %432 = vmatprep.subr.bf16.mxu0 0
    %433 = vmatpush1.bf16.msra.mxu0 0
    %434 = vmatprep.subr.bf16.mxu0 0
    %435 = vmatpush1.bf16.msra.mxu0 0
    %436 = vmatprep.subr.bf16.mxu0 0
    %437 = vmatpush1.bf16.msra.mxu0 0
    %438 = vmatprep.subr.bf16.mxu0 0
    %439 = vmatpush1.bf16.msra.mxu0 0
    %440 = vmatprep.subr.bf16.mxu0 0
    %441 = vmatpush1.bf16.msra.mxu0 0
    %442 = vmatprep.subr.bf16.mxu0 0
    %443 = vmatpush1.bf16.msra.mxu0 0
    %444 = vmatprep.subr.bf16.mxu0 0
    %445 = vmatpush1.bf16.msra.mxu0 0
    %446 = vmatprep.mubr.bf16.mxu0 0
    %447 = vmatmul.mubr.bf16.gmra.mrb[0].mxu0 %v412
    %v448 = vpop.f32.mrb[0].mxu0
    %v449 = vadd.f32 %v390, %v448
    %v450 = vpop.f32.mrb[0].mxu0
    %v451 = vpop.f32.mrb[0].mxu0
    %v452 = vpop.f32.mrb[0].mxu0
    %453 = vdwg.mxu0
    %v454 = vpack.c.bf16 %v449, %v449
    %s455 = scalar_lea.vmem [#allocation8], 4
    %456 = vst.msk [vmem:[%s455] sm:$0x1] %vm135, %v454
    %v457 = vld [vmem:[#allocation2 + $0x5] sm:$0x1]
    %v458 = vld [vmem:[#allocation2 + $0xd] sm:$0x1]
    %v459 = vpack.c.bf16 %v457, %v457
    %v460 = vpack.c.bf16 %v458, %v458
    %v461 = vld [vmem:[#allocation5] sm:$0xf]
    %v462 = vld [vmem:[#allocation5 + $0x4] sm:$0xf]
    %v463 = vld [vmem:[#allocation5 + $0x8] sm:$0xf]
    %v464 = vld [vmem:[#allocation5 + $0xc] sm:$0xf]
    %v465 = vld [vmem:[#allocation7] sm:$0x1]
    %v467 = vlaneseq
    %v468 = vshrl.u32 %v467, 7
    %v469 = vsub.s32 0, %v468
    %v470 = vrot.slane %v465, %v469
    %v474 = vunpack.c.l.b16 %v459
    %v475 = vunpack.c.l.b16 %v460
    %v476 = vrot.slane %v475, 7
    %v477 = vsel %vm75, %v476, %v474
    %v478 = vpack.c.b16 %v477, %v477
    %v483 = vunpack.c.l.b16 %v461
    %v484 = vunpack.c.l.b16 %v462
    %v485 = vunpack.c.l.b16 %v463
    %v486 = vunpack.c.l.b16 %v464
    %v487 = vpack.c.b16 %v484, %v483
    %v488 = vpack.c.b16 %v486, %v485
    %v492 = vsel %vm90, %v478, 0
    %494 = vmatprep.subr.bf16.mxu0 0
    %495 = vmatpush1.bf16.msra.mxu0 %v487
    %496 = vmatprep.subr.bf16.mxu0 0
    %497 = vmatpush1.bf16.msra.mxu0 %v488
    %498 = vmatprep.subr.bf16.mxu0 0
    %499 = vmatpush1.bf16.msra.mxu0 0
    %500 = vmatprep.subr.bf16.mxu0 0
    %501 = vmatpush1.bf16.msra.mxu0 0
    %502 = vmatprep.subr.bf16.mxu0 0
    %503 = vmatpush1.bf16.msra.mxu0 0
    %504 = vmatprep.subr.bf16.mxu0 0
    %505 = vmatpush1.bf16.msra.mxu0 0
    %506 = vmatprep.subr.bf16.mxu0 0
    %507 = vmatpush1.bf16.msra.mxu0 0
    %508 = vmatprep.subr.bf16.mxu0 0
    %509 = vmatpush1.bf16.msra.mxu0 0
    %510 = vmatprep.subr.bf16.mxu0 0
    %511 = vmatpush1.bf16.msra.mxu0 0
    %512 = vmatprep.subr.bf16.mxu0 0
    %513 = vmatpush1.bf16.msra.mxu0 0
    %514 = vmatprep.subr.bf16.mxu0 0
    %515 = vmatpush1.bf16.msra.mxu0 0
    %516 = vmatprep.subr.bf16.mxu0 0
    %517 = vmatpush1.bf16.msra.mxu0 0
    %518 = vmatprep.subr.bf16.mxu0 0
    %519 = vmatpush1.bf16.msra.mxu0 0
    %520 = vmatprep.subr.bf16.mxu0 0
    %521 = vmatpush1.bf16.msra.mxu0 0
    %522 = vmatprep.subr.bf16.mxu0 0
    %523 = vmatpush1.bf16.msra.mxu0 0
    %524 = vmatprep.subr.bf16.mxu0 0
    %525 = vmatpush1.bf16.msra.mxu0 0
    %526 = vmatprep.mubr.bf16.mxu0 0
    %527 = vmatmul.mubr.bf16.gmra.mrb[0].mxu0 %v492
    %v528 = vpop.f32.mrb[0].mxu0
    %v529 = vadd.f32 %v470, %v528
    %v530 = vpop.f32.mrb[0].mxu0
    %v531 = vpop.f32.mrb[0].mxu0
    %v532 = vpop.f32.mrb[0].mxu0
    %533 = vdwg.mxu0
    %v534 = vpack.c.bf16 %v529, %v529
    %s535 = scalar_lea.vmem [#allocation8], 5
    %536 = vst.msk [vmem:[%s535] sm:$0x1] %vm135, %v534
    %v537 = vld [vmem:[#allocation2 + $0x6] sm:$0x1]
    %v538 = vld [vmem:[#allocation2 + $0xe] sm:$0x1]
    %v539 = vpack.c.bf16 %v537, %v537
    %v540 = vpack.c.bf16 %v538, %v538
    %v541 = vld [vmem:[#allocation5] sm:$0xf]
    %v542 = vld [vmem:[#allocation5 + $0x4] sm:$0xf]
    %v543 = vld [vmem:[#allocation5 + $0x8] sm:$0xf]
    %v544 = vld [vmem:[#allocation5 + $0xc] sm:$0xf]
    %v545 = vld [vmem:[#allocation7] sm:$0x1]
    %v547 = vlaneseq
    %v548 = vshrl.u32 %v547, 7
    %v549 = vsub.s32 0, %v548
    %v550 = vrot.slane %v545, %v549
    %v554 = vunpack.c.l.b16 %v539
    %v555 = vunpack.c.l.b16 %v540
    %v556 = vrot.slane %v555, 7
    %v557 = vsel %vm75, %v556, %v554
    %v558 = vpack.c.b16 %v557, %v557
    %v563 = vunpack.c.l.b16 %v541
    %v564 = vunpack.c.l.b16 %v542
    %v565 = vunpack.c.l.b16 %v543
    %v566 = vunpack.c.l.b16 %v544
    %v567 = vpack.c.b16 %v564, %v563
    %v568 = vpack.c.b16 %v566, %v565
    %v572 = vsel %vm90, %v558, 0
    %574 = vmatprep.subr.bf16.mxu0 0
    %575 = vmatpush1.bf16.msra.mxu0 %v567
    %576 = vmatprep.subr.bf16.mxu0 0
    %577 = vmatpush1.bf16.msra.mxu0 %v568
    %578 = vmatprep.subr.bf16.mxu0 0
    %579 = vmatpush1.bf16.msra.mxu0 0
    %580 = vmatprep.subr.bf16.mxu0 0
    %581 = vmatpush1.bf16.msra.mxu0 0
    %582 = vmatprep.subr.bf16.mxu0 0
    %583 = vmatpush1.bf16.msra.mxu0 0
    %584 = vmatprep.subr.bf16.mxu0 0
    %585 = vmatpush1.bf16.msra.mxu0 0
    %586 = vmatprep.subr.bf16.mxu0 0
    %587 = vmatpush1.bf16.msra.mxu0 0
    %588 = vmatprep.subr.bf16.mxu0 0
    %589 = vmatpush1.bf16.msra.mxu0 0
    %590 = vmatprep.subr.bf16.mxu0 0
    %591 = vmatpush1.bf16.msra.mxu0 0
    %592 = vmatprep.subr.bf16.mxu0 0
    %593 = vmatpush1.bf16.msra.mxu0 0
    %594 = vmatprep.subr.bf16.mxu0 0
    %595 = vmatpush1.bf16.msra.mxu0 0
    %596 = vmatprep.subr.bf16.mxu0 0
    %597 = vmatpush1.bf16.msra.mxu0 0
    %598 = vmatprep.subr.bf16.mxu0 0
    %599 = vmatpush1.bf16.msra.mxu0 0
    %600 = vmatprep.subr.bf16.mxu0 0
    %601 = vmatpush1.bf16.msra.mxu0 0
    %602 = vmatprep.subr.bf16.mxu0 0
    %603 = vmatpush1.bf16.msra.mxu0 0
    %604 = vmatprep.subr.bf16.mxu0 0
    %605 = vmatpush1.bf16.msra.mxu0 0
    %606 = vmatprep.mubr.bf16.mxu0 0
    %607 = vmatmul.mubr.bf16.gmra.mrb[0].mxu0 %v572
    %v608 = vpop.f32.mrb[0].mxu0
    %v609 = vadd.f32 %v550, %v608
    %v610 = vpop.f32.mrb[0].mxu0
    %v611 = vpop.f32.mrb[0].mxu0
    %v612 = vpop.f32.mrb[0].mxu0
    %613 = vdwg.mxu0
    %v614 = vpack.c.bf16 %v609, %v609
    %s615 = scalar_lea.vmem [#allocation8], 6
    %616 = vst.msk [vmem:[%s615] sm:$0x1] %vm135, %v614
    %v617 = vld [vmem:[#allocation2 + $0x7] sm:$0x1]
    %v618 = vld [vmem:[#allocation2 + $0xf] sm:$0x1]
    %v619 = vpack.c.bf16 %v617, %v617
    %v620 = vpack.c.bf16 %v618, %v618
    %v621 = vld [vmem:[#allocation5] sm:$0xf]
    %v622 = vld [vmem:[#allocation5 + $0x4] sm:$0xf]
    %v623 = vld [vmem:[#allocation5 + $0x8] sm:$0xf]
    %v624 = vld [vmem:[#allocation5 + $0xc] sm:$0xf]
    %v625 = vld [vmem:[#allocation7] sm:$0x1]
    %v627 = vlaneseq
    %v628 = vshrl.u32 %v627, 7
    %v629 = vsub.s32 0, %v628
    %v630 = vrot.slane %v625, %v629
    %v634 = vunpack.c.l.b16 %v619
    %v635 = vunpack.c.l.b16 %v620
    %v636 = vrot.slane %v635, 7
    %v637 = vsel %vm75, %v636, %v634
    %v638 = vpack.c.b16 %v637, %v637
    %v643 = vunpack.c.l.b16 %v621
    %v644 = vunpack.c.l.b16 %v622
    %v645 = vunpack.c.l.b16 %v623
    %v646 = vunpack.c.l.b16 %v624
    %v647 = vpack.c.b16 %v644, %v643
    %v648 = vpack.c.b16 %v646, %v645
    %v652 = vsel %vm90, %v638, 0
    %654 = vmatprep.subr.bf16.mxu0 0
    %655 = vmatpush1.bf16.msra.mxu0 %v647
    %656 = vmatprep.subr.bf16.mxu0 0
    %657 = vmatpush1.bf16.msra.mxu0 %v648
    %658 = vmatprep.subr.bf16.mxu0 0
    %659 = vmatpush1.bf16.msra.mxu0 0
    %660 = vmatprep.subr.bf16.mxu0 0
    %661 = vmatpush1.bf16.msra.mxu0 0
    %662 = vmatprep.subr.bf16.mxu0 0
    %663 = vmatpush1.bf16.msra.mxu0 0
    %664 = vmatprep.subr.bf16.mxu0 0
    %665 = vmatpush1.bf16.msra.mxu0 0
    %666 = vmatprep.subr.bf16.mxu0 0
    %667 = vmatpush1.bf16.msra.mxu0 0
    %668 = vmatprep.subr.bf16.mxu0 0
    %669 = vmatpush1.bf16.msra.mxu0 0
    %670 = vmatprep.subr.bf16.mxu0 0
    %671 = vmatpush1.bf16.msra.mxu0 0
    %672 = vmatprep.subr.bf16.mxu0 0
    %673 = vmatpush1.bf16.msra.mxu0 0
    %674 = vmatprep.subr.bf16.mxu0 0
    %675 = vmatpush1.bf16.msra.mxu0 0
    %676 = vmatprep.subr.bf16.mxu0 0
    %677 = vmatpush1.bf16.msra.mxu0 0
    %678 = vmatprep.subr.bf16.mxu0 0
    %679 = vmatpush1.bf16.msra.mxu0 0
    %680 = vmatprep.subr.bf16.mxu0 0
    %681 = vmatpush1.bf16.msra.mxu0 0
    %682 = vmatprep.subr.bf16.mxu0 0
    %683 = vmatpush1.bf16.msra.mxu0 0
    %684 = vmatprep.subr.bf16.mxu0 0
    %685 = vmatpush1.bf16.msra.mxu0 0
    %686 = vmatprep.mubr.bf16.mxu0 0
    %687 = vmatmul.mubr.bf16.gmra.mrb[0].mxu0 %v652
    %v688 = vpop.f32.mrb[0].mxu0
    %v689 = vadd.f32 %v630, %v688
    %v690 = vpop.f32.mrb[0].mxu0
    %v691 = vpop.f32.mrb[0].mxu0
    %v692 = vpop.f32.mrb[0].mxu0
    %693 = vdwg.mxu0
    %v694 = vpack.c.bf16 %v689, %v689
    %s695 = scalar_lea.vmem [#allocation8], 7
    %696 = vst.msk [vmem:[%s695] sm:$0x1] %vm135, %v694
    // Predicated region
    $region26: #{rnn_language_model_forward.3} parent=1 // pred_check
      _
    $region27: #{rnn_language_model_forward.3} parent=1 // pred_check_branch
      %698 = sbr.rel (0) target = $region29
    $region28: #{rnn_language_model_forward.3} parent=1 // pred_region
      %s700 = ssub.s32 128, 128
      %701 = vsyncadd [#allocation4], %s700
      %s702 = sshll.u32 [#allocation8], 4
      %s703 = int_to_ptr.vmem [resolvable:$true] %s702
      %708 = dma.vmem_to_hbm [thread:$0]  %s703, 128, %s3, [#allocation4], 16, 16, 1
    $region29: #{rnn_language_model_forward.3} parent=1 // pred_fallthru
      _
    // Predicated region
    $region30: #{rnn_language_model_forward.3} parent=1 // pred_check
      _
    $region31: #{rnn_language_model_forward.3} parent=1 // pred_check_branch
      %710 = sbr.rel (0) target = $region33
    $region32: #{rnn_language_model_forward.3} parent=1 // pred_region
      %711 = dma.done [#allocation4], 128
    $region33: #{rnn_language_model_forward.3} parent=1 // pred_fallthru
      _
    %712 = vsyncpa [#allocation3], 1
    %713 = vsyncpa [#allocation6], 1
    %714 = vsyncpa [#allocation4], 1

// kernel: rnn_language_model_forward.5
$region0: #{rnn_language_model_forward.5}
  #allocation0 [shape = 'u32[]', space=smem, size = 0x4, offset = 0x4, fixed_abs, tag = 'smem constant byte address 0x4 - core index']
  #allocation1 [shape = 'u32[144,128]{1,0:T(1,128)}', space=vmem, size = 0x12000, scoped, tag = 'internal scratch']
  %s0 = inlined_call_operand.hbm [shape: bf16[8,2,32], index: 0, kind: input, shape index: {}]
  %s1 = inlined_call_operand.hbm [shape: bf16[32,64], index: 1, kind: input, shape index: {}]
  %s2 = inlined_call_operand.hbm [shape: f32[1,64], index: 2, kind: input, shape index: {}]
  %s3 = inlined_call_operand.hbm [shape: f32[2,8,64], index: 3, kind: output, shape index: {}]
  %s4 = sld [smem:[#allocation0]]
  $region34: #{rnn_language_model_forward.5} parent=0
    _
  %s6 = ssub.s32 1, %s4
  %s7 = scalar_select 0, %s6, %s4
  $region1: #{rnn_language_model_forward.5} parent=0
    #allocation2 [shape = 'u8[4096]{0}', space=vmem, size = 0x1000, scoped, tag = 'input window, operand 0, single buffered']
    #allocation3 [shape = 's32[1]{0}', space=sflag, size = 0x4, scoped, tag = 'scoped memory for rnn_language_model_forward.5']
    #allocation4 [shape = 's32[1]{0}', space=sflag, size = 0x4, scoped, tag = 'scoped memory for rnn_language_model_forward.5']
    #allocation5 [shape = 'u8[8192]{0}', space=vmem, size = 0x2000, scoped, tag = 'input window, operand 1, single buffered']
    #allocation6 [shape = 's32[1]{0}', space=sflag, size = 0x4, scoped, tag = 'scoped memory for rnn_language_model_forward.5']
    #allocation7 [shape = 'u8[512]{0}', space=vmem, size = 0x400, scoped, tag = 'input window, operand 2, single buffered']
    #allocation8 [shape = 'u8[8192]{0}', space=vmem, size = 0x2000, scoped, tag = 'output window, operand 0, single buffered']
    %8 = vsyncpa [#allocation3], 0
    %9 = vsyncpa [#allocation6], 0
    %10 = vsyncpa [#allocation4], 0
    // Predicated region
    $region2: #{rnn_language_model_forward.5} parent=1 // pred_check
      _
    $region3: #{rnn_language_model_forward.5} parent=1 // pred_check_branch
      %12 = sbr.rel (0) target = $region5
    $region4: #{rnn_language_model_forward.5} parent=1 // pred_region
      %s14 = ssub.s32 128, 128
      %15 = vsyncadd [#allocation3], %s14
      %s16 = sshll.u32 [#allocation2], 4
      %s17 = int_to_ptr.vmem [resolvable:$true] %s16
      %22 = dma.hbm_to_vmem [thread:$0]  %s0, 128, %s17, [#allocation3], 16, 16, 1
    $region5: #{rnn_language_model_forward.5} parent=1 // pred_fallthru
      _
    // Predicated region
    $region6: #{rnn_language_model_forward.5} parent=1 // pred_check
      _
    $region7: #{rnn_language_model_forward.5} parent=1 // pred_check_branch
      %24 = sbr.rel (0) target = $region9
    $region8: #{rnn_language_model_forward.5} parent=1 // pred_region
      %s26 = ssub.s32 256, 256
      %27 = vsyncadd [#allocation6], %s26
      %s28 = sshll.u32 [#allocation5], 4
      %s29 = int_to_ptr.vmem [resolvable:$true] %s28
      %34 = dma.hbm_to_vmem [thread:$0]  %s1, 256, %s29, [#allocation6], 64, 64, 4
    $region9: #{rnn_language_model_forward.5} parent=1 // pred_fallthru
      _
    // Predicated region
    $region10: #{rnn_language_model_forward.5} parent=1 // pred_check
      _
    $region11: #{rnn_language_model_forward.5} parent=1 // pred_check_branch
      %36 = sbr.rel (0) target = $region13
    $region12: #{rnn_language_model_forward.5} parent=1 // pred_region
      %s38 = ssub.s32 16, 16
      %39 = vsyncadd [#allocation6], %s38
      %s41 = sshll.u32 [#allocation7], 4
      %s42 = int_to_ptr.vmem [resolvable:$true] %s41
      %44 = dma.hbm_to_vmem [thread:$0]  %s2, 16, %s42, [#allocation6]
    $region13: #{rnn_language_model_forward.5} parent=1 // pred_fallthru
      _
    // Predicated region
    $region14: #{rnn_language_model_forward.5} parent=1 // pred_check
      _
    $region15: #{rnn_language_model_forward.5} parent=1 // pred_check_branch
      %46 = sbr.rel (0) target = $region17
    $region16: #{rnn_language_model_forward.5} parent=1 // pred_region
      %47 = dma.done [#allocation3], 128
    $region17: #{rnn_language_model_forward.5} parent=1 // pred_fallthru
      _
    // Predicated region
    $region18: #{rnn_language_model_forward.5} parent=1 // pred_check
      _
    $region19: #{rnn_language_model_forward.5} parent=1 // pred_check_branch
      %49 = sbr.rel (0) target = $region21
    $region20: #{rnn_language_model_forward.5} parent=1 // pred_region
      %50 = dma.done [#allocation6], 256
    $region21: #{rnn_language_model_forward.5} parent=1 // pred_fallthru
      _
    // Predicated region
    $region22: #{rnn_language_model_forward.5} parent=1 // pred_check
      _
    $region23: #{rnn_language_model_forward.5} parent=1 // pred_check_branch
      %52 = sbr.rel (0) target = $region25
    $region24: #{rnn_language_model_forward.5} parent=1 // pred_region
      %53 = dma.done [#allocation6], 16
    $region25: #{rnn_language_model_forward.5} parent=1 // pred_fallthru
      _
    %v55 = vld [vmem:[#allocation2] sm:$0x1]
    %v56 = vld [vmem:[#allocation5] sm:$0xf]
    %v57 = vld [vmem:[#allocation5 + $0x4] sm:$0xf]
    %v58 = vld [vmem:[#allocation5 + $0x8] sm:$0xf]
    %v59 = vld [vmem:[#allocation5 + $0xc] sm:$0xf]
    %v60 = vld [vmem:[#allocation7] sm:$0x1]
    %v62 = vlaneseq
    %v63 = vshrl.u32 %v62, 7
    %v64 = vsub.s32 0, %v63
    %v65 = vrot.slane %v60, %v64
    %v71 = vunpack.c.l.b16 %v56
    %v72 = vunpack.c.l.b16 %v57
    %v73 = vunpack.c.l.b16 %v58
    %v74 = vunpack.c.l.b16 %v59
    %v75 = vpack.c.b16 %v72, %v71
    %v76 = vpack.c.b16 %v74, %v73
    %vm79 = vcmask 261120
    %v81 = vsel %vm79, %v55, 0
    %83 = vmatprep.subr.bf16.mxu0 0
    %84 = vmatpush1.bf16.msra.mxu0 %v75
    %85 = vmatprep.subr.bf16.mxu0 0
    %86 = vmatpush1.bf16.msra.mxu0 %v76
    %87 = vmatprep.subr.bf16.mxu0 0
    %88 = vmatpush1.bf16.msra.mxu0 0
    %89 = vmatprep.subr.bf16.mxu0 0
    %90 = vmatpush1.bf16.msra.mxu0 0
    %91 = vmatprep.subr.bf16.mxu0 0
    %92 = vmatpush1.bf16.msra.mxu0 0
    %93 = vmatprep.subr.bf16.mxu0 0
    %94 = vmatpush1.bf16.msra.mxu0 0
    %95 = vmatprep.subr.bf16.mxu0 0
    %96 = vmatpush1.bf16.msra.mxu0 0
    %97 = vmatprep.subr.bf16.mxu0 0
    %98 = vmatpush1.bf16.msra.mxu0 0
    %99 = vmatprep.subr.bf16.mxu0 0
    %100 = vmatpush1.bf16.msra.mxu0 0
    %101 = vmatprep.subr.bf16.mxu0 0
    %102 = vmatpush1.bf16.msra.mxu0 0
    %103 = vmatprep.subr.bf16.mxu0 0
    %104 = vmatpush1.bf16.msra.mxu0 0
    %105 = vmatprep.subr.bf16.mxu0 0
    %106 = vmatpush1.bf16.msra.mxu0 0
    %107 = vmatprep.subr.bf16.mxu0 0
    %108 = vmatpush1.bf16.msra.mxu0 0
    %109 = vmatprep.subr.bf16.mxu0 0
    %110 = vmatpush1.bf16.msra.mxu0 0
    %111 = vmatprep.subr.bf16.mxu0 0
    %112 = vmatpush1.bf16.msra.mxu0 0
    %113 = vmatprep.subr.bf16.mxu0 0
    %114 = vmatpush1.bf16.msra.mxu0 0
    %115 = vmatprep.mubr.bf16.mxu0 0
    %116 = vmatmul.mubr.bf16.gmra.mrb[0].mxu0 %v81
    %v117 = vpop.f32.mrb[0].mxu0
    %v118 = vadd.f32 %v65, %v117
    %v119 = vpop.f32.mrb[0].mxu0
    %v120 = vpop.f32.mrb[0].mxu0
    %v121 = vpop.f32.mrb[0].mxu0
    %122 = vdwg.mxu0
    %v125 = vunpack.c.l.s4 1966171168
    %v126 = vunpack.c.0.s8 %v125
    %v127 = vlaneseq
    %v128 = vshrl.u32 %v127, 7
    %v129 = vsub.s32 %v126, %v128
    %v130 = vrot.slane %v118, %v129
    %v131 = vcombine.high %v130, %v130
    %v133 = vunpack.c.l.s4 1966171168
    %v134 = vunpack.c.0.s8 %v133
    %v135 = vlaneseq
    %v136 = vshrl.u32 %v135, 7
    %v137 = vsub.s32 %v134, %v136
    %v138 = vrot.slane %v130, %v137
    %v140 = vunpack.c.l.s4 1966171168
    %v141 = vunpack.c.0.s8 %v140
    %v142 = vlaneseq
    %v143 = vshrl.u32 %v142, 7
    %v144 = vsub.s32 %v141, %v143
    %v145 = vrot.slane %v131, %v144
    %vm148 = vcmask 516096
    %149 = vst.msk [vmem:[#allocation8] sm:$0x1] %vm148, %v138
    %150 = vst.msk [vmem:[#allocation8 + $0x8] sm:$0x1] %vm148, %v145
    %s151 = scalar_lea.vmem [#allocation2], 1
    %v152 = vld [vmem:[%s151] sm:$0x1]
    %v153 = vld [vmem:[#allocation5] sm:$0xf]
    %v154 = vld [vmem:[#allocation5 + $0x4] sm:$0xf]
    %v155 = vld [vmem:[#allocation5 + $0x8] sm:$0xf]
    %v156 = vld [vmem:[#allocation5 + $0xc] sm:$0xf]
    %v157 = vld [vmem:[#allocation7] sm:$0x1]
    %v159 = vlaneseq
    %v160 = vshrl.u32 %v159, 7
    %v161 = vsub.s32 0, %v160
    %v162 = vrot.slane %v157, %v161
    %v168 = vunpack.c.l.b16 %v153
    %v169 = vunpack.c.l.b16 %v154
    %v170 = vunpack.c.l.b16 %v155
    %v171 = vunpack.c.l.b16 %v156
    %v172 = vpack.c.b16 %v169, %v168
    %v173 = vpack.c.b16 %v171, %v170
    %v177 = vsel %vm79, %v152, 0
    %179 = vmatprep.subr.bf16.mxu0 0
    %180 = vmatpush1.bf16.msra.mxu0 %v172
    %181 = vmatprep.subr.bf16.mxu0 0
    %182 = vmatpush1.bf16.msra.mxu0 %v173
    %183 = vmatprep.subr.bf16.mxu0 0
    %184 = vmatpush1.bf16.msra.mxu0 0
    %185 = vmatprep.subr.bf16.mxu0 0
    %186 = vmatpush1.bf16.msra.mxu0 0
    %187 = vmatprep.subr.bf16.mxu0 0
    %188 = vmatpush1.bf16.msra.mxu0 0
    %189 = vmatprep.subr.bf16.mxu0 0
    %190 = vmatpush1.bf16.msra.mxu0 0
    %191 = vmatprep.subr.bf16.mxu0 0
    %192 = vmatpush1.bf16.msra.mxu0 0
    %193 = vmatprep.subr.bf16.mxu0 0
    %194 = vmatpush1.bf16.msra.mxu0 0
    %195 = vmatprep.subr.bf16.mxu0 0
    %196 = vmatpush1.bf16.msra.mxu0 0
    %197 = vmatprep.subr.bf16.mxu0 0
    %198 = vmatpush1.bf16.msra.mxu0 0
    %199 = vmatprep.subr.bf16.mxu0 0
    %200 = vmatpush1.bf16.msra.mxu0 0
    %201 = vmatprep.subr.bf16.mxu0 0
    %202 = vmatpush1.bf16.msra.mxu0 0
    %203 = vmatprep.subr.bf16.mxu0 0
    %204 = vmatpush1.bf16.msra.mxu0 0
    %205 = vmatprep.subr.bf16.mxu0 0
    %206 = vmatpush1.bf16.msra.mxu0 0
    %207 = vmatprep.subr.bf16.mxu0 0
    %208 = vmatpush1.bf16.msra.mxu0 0
    %209 = vmatprep.subr.bf16.mxu0 0
    %210 = vmatpush1.bf16.msra.mxu0 0
    %211 = vmatprep.mubr.bf16.mxu0 0
    %212 = vmatmul.mubr.bf16.gmra.mrb[0].mxu0 %v177
    %v213 = vpop.f32.mrb[0].mxu0
    %v214 = vadd.f32 %v162, %v213
    %v215 = vpop.f32.mrb[0].mxu0
    %v216 = vpop.f32.mrb[0].mxu0
    %v217 = vpop.f32.mrb[0].mxu0
    %218 = vdwg.mxu0
    %v221 = vunpack.c.l.s4 1966171168
    %v222 = vunpack.c.0.s8 %v221
    %v223 = vlaneseq
    %v224 = vshrl.u32 %v223, 7
    %v225 = vsub.s32 %v222, %v224
    %v226 = vrot.slane %v214, %v225
    %v227 = vcombine.high %v226, %v226
    %v229 = vunpack.c.l.s4 1966171168
    %v230 = vunpack.c.0.s8 %v229
    %v231 = vlaneseq
    %v232 = vshrl.u32 %v231, 7
    %v233 = vsub.s32 %v230, %v232
    %v234 = vrot.slane %v226, %v233
    %v236 = vunpack.c.l.s4 1966171168
    %v237 = vunpack.c.0.s8 %v236
    %v238 = vlaneseq
    %v239 = vshrl.u32 %v238, 7
    %v240 = vsub.s32 %v237, %v239
    %v241 = vrot.slane %v227, %v240
    %244 = vst.msk [vmem:[#allocation8 + $0x1] sm:$0x1] %vm148, %v234
    %245 = vst.msk [vmem:[#allocation8 + $0x9] sm:$0x1] %vm148, %v241
    %s246 = scalar_lea.vmem [#allocation2], 2
    %v247 = vld [vmem:[%s246] sm:$0x1]
    %v248 = vld [vmem:[#allocation5] sm:$0xf]
    %v249 = vld [vmem:[#allocation5 + $0x4] sm:$0xf]
    %v250 = vld [vmem:[#allocation5 + $0x8] sm:$0xf]
    %v251 = vld [vmem:[#allocation5 + $0xc] sm:$0xf]
    %v252 = vld [vmem:[#allocation7] sm:$0x1]
    %v254 = vlaneseq
    %v255 = vshrl.u32 %v254, 7
    %v256 = vsub.s32 0, %v255
    %v257 = vrot.slane %v252, %v256
    %v263 = vunpack.c.l.b16 %v248
    %v264 = vunpack.c.l.b16 %v249
    %v265 = vunpack.c.l.b16 %v250
    %v266 = vunpack.c.l.b16 %v251
    %v267 = vpack.c.b16 %v264, %v263
    %v268 = vpack.c.b16 %v266, %v265
    %v272 = vsel %vm79, %v247, 0
    %274 = vmatprep.subr.bf16.mxu0 0
    %275 = vmatpush1.bf16.msra.mxu0 %v267
    %276 = vmatprep.subr.bf16.mxu0 0
    %277 = vmatpush1.bf16.msra.mxu0 %v268
    %278 = vmatprep.subr.bf16.mxu0 0
    %279 = vmatpush1.bf16.msra.mxu0 0
    %280 = vmatprep.subr.bf16.mxu0 0
    %281 = vmatpush1.bf16.msra.mxu0 0
    %282 = vmatprep.subr.bf16.mxu0 0
    %283 = vmatpush1.bf16.msra.mxu0 0
    %284 = vmatprep.subr.bf16.mxu0 0
    %285 = vmatpush1.bf16.msra.mxu0 0
    %286 = vmatprep.subr.bf16.mxu0 0
    %287 = vmatpush1.bf16.msra.mxu0 0
    %288 = vmatprep.subr.bf16.mxu0 0
    %289 = vmatpush1.bf16.msra.mxu0 0
    %290 = vmatprep.subr.bf16.mxu0 0
    %291 = vmatpush1.bf16.msra.mxu0 0
    %292 = vmatprep.subr.bf16.mxu0 0
    %293 = vmatpush1.bf16.msra.mxu0 0
    %294 = vmatprep.subr.bf16.mxu0 0
    %295 = vmatpush1.bf16.msra.mxu0 0
    %296 = vmatprep.subr.bf16.mxu0 0
    %297 = vmatpush1.bf16.msra.mxu0 0
    %298 = vmatprep.subr.bf16.mxu0 0
    %299 = vmatpush1.bf16.msra.mxu0 0
    %300 = vmatprep.subr.bf16.mxu0 0
    %301 = vmatpush1.bf16.msra.mxu0 0
    %302 = vmatprep.subr.bf16.mxu0 0
    %303 = vmatpush1.bf16.msra.mxu0 0
    %304 = vmatprep.subr.bf16.mxu0 0
    %305 = vmatpush1.bf16.msra.mxu0 0
    %306 = vmatprep.mubr.bf16.mxu0 0
    %307 = vmatmul.mubr.bf16.gmra.mrb[0].mxu0 %v272
    %v308 = vpop.f32.mrb[0].mxu0
    %v309 = vadd.f32 %v257, %v308
    %v310 = vpop.f32.mrb[0].mxu0
    %v311 = vpop.f32.mrb[0].mxu0
    %v312 = vpop.f32.mrb[0].mxu0
    %313 = vdwg.mxu0
    %v316 = vunpack.c.l.s4 1966171168
    %v317 = vunpack.c.0.s8 %v316
    %v318 = vlaneseq
    %v319 = vshrl.u32 %v318, 7
    %v320 = vsub.s32 %v317, %v319
    %v321 = vrot.slane %v309, %v320
    %v322 = vcombine.high %v321, %v321
    %v324 = vunpack.c.l.s4 1966171168
    %v325 = vunpack.c.0.s8 %v324
    %v326 = vlaneseq
    %v327 = vshrl.u32 %v326, 7
    %v328 = vsub.s32 %v325, %v327
    %v329 = vrot.slane %v321, %v328
    %v331 = vunpack.c.l.s4 1966171168
    %v332 = vunpack.c.0.s8 %v331
    %v333 = vlaneseq
    %v334 = vshrl.u32 %v333, 7
    %v335 = vsub.s32 %v332, %v334
    %v336 = vrot.slane %v322, %v335
    %339 = vst.msk [vmem:[#allocation8 + $0x2] sm:$0x1] %vm148, %v329
    %340 = vst.msk [vmem:[#allocation8 + $0xa] sm:$0x1] %vm148, %v336
    %s341 = scalar_lea.vmem [#allocation2], 3
    %v342 = vld [vmem:[%s341] sm:$0x1]
    %v343 = vld [vmem:[#allocation5] sm:$0xf]
    %v344 = vld [vmem:[#allocation5 + $0x4] sm:$0xf]
    %v345 = vld [vmem:[#allocation5 + $0x8] sm:$0xf]
    %v346 = vld [vmem:[#allocation5 + $0xc] sm:$0xf]
    %v347 = vld [vmem:[#allocation7] sm:$0x1]
    %v349 = vlaneseq
    %v350 = vshrl.u32 %v349, 7
    %v351 = vsub.s32 0, %v350
    %v352 = vrot.slane %v347, %v351
    %v358 = vunpack.c.l.b16 %v343
    %v359 = vunpack.c.l.b16 %v344
    %v360 = vunpack.c.l.b16 %v345
    %v361 = vunpack.c.l.b16 %v346
    %v362 = vpack.c.b16 %v359, %v358
    %v363 = vpack.c.b16 %v361, %v360
    %v367 = vsel %vm79, %v342, 0
    %369 = vmatprep.subr.bf16.mxu0 0
    %370 = vmatpush1.bf16.msra.mxu0 %v362
    %371 = vmatprep.subr.bf16.mxu0 0
    %372 = vmatpush1.bf16.msra.mxu0 %v363
    %373 = vmatprep.subr.bf16.mxu0 0
    %374 = vmatpush1.bf16.msra.mxu0 0
    %375 = vmatprep.subr.bf16.mxu0 0
    %376 = vmatpush1.bf16.msra.mxu0 0
    %377 = vmatprep.subr.bf16.mxu0 0
    %378 = vmatpush1.bf16.msra.mxu0 0
    %379 = vmatprep.subr.bf16.mxu0 0
    %380 = vmatpush1.bf16.msra.mxu0 0
    %381 = vmatprep.subr.bf16.mxu0 0
    %382 = vmatpush1.bf16.msra.mxu0 0
    %383 = vmatprep.subr.bf16.mxu0 0
    %384 = vmatpush1.bf16.msra.mxu0 0
    %385 = vmatprep.subr.bf16.mxu0 0
    %386 = vmatpush1.bf16.msra.mxu0 0
    %387 = vmatprep.subr.bf16.mxu0 0
    %388 = vmatpush1.bf16.msra.mxu0 0
    %389 = vmatprep.subr.bf16.mxu0 0
    %390 = vmatpush1.bf16.msra.mxu0 0
    %391 = vmatprep.subr.bf16.mxu0 0
    %392 = vmatpush1.bf16.msra.mxu0 0
    %393 = vmatprep.subr.bf16.mxu0 0
    %394 = vmatpush1.bf16.msra.mxu0 0
    %395 = vmatprep.subr.bf16.mxu0 0
    %396 = vmatpush1.bf16.msra.mxu0 0
    %397 = vmatprep.subr.bf16.mxu0 0
    %398 = vmatpush1.bf16.msra.mxu0 0
    %399 = vmatprep.subr.bf16.mxu0 0
    %400 = vmatpush1.bf16.msra.mxu0 0
    %401 = vmatprep.mubr.bf16.mxu0 0
    %402 = vmatmul.mubr.bf16.gmra.mrb[0].mxu0 %v367
    %v403 = vpop.f32.mrb[0].mxu0
    %v404 = vadd.f32 %v352, %v403
    %v405 = vpop.f32.mrb[0].mxu0
    %v406 = vpop.f32.mrb[0].mxu0
    %v407 = vpop.f32.mrb[0].mxu0
    %408 = vdwg.mxu0
    %v411 = vunpack.c.l.s4 1966171168
    %v412 = vunpack.c.0.s8 %v411
    %v413 = vlaneseq
    %v414 = vshrl.u32 %v413, 7
    %v415 = vsub.s32 %v412, %v414
    %v416 = vrot.slane %v404, %v415
    %v417 = vcombine.high %v416, %v416
    %v419 = vunpack.c.l.s4 1966171168
    %v420 = vunpack.c.0.s8 %v419
    %v421 = vlaneseq
    %v422 = vshrl.u32 %v421, 7
    %v423 = vsub.s32 %v420, %v422
    %v424 = vrot.slane %v416, %v423
    %v426 = vunpack.c.l.s4 1966171168
    %v427 = vunpack.c.0.s8 %v426
    %v428 = vlaneseq
    %v429 = vshrl.u32 %v428, 7
    %v430 = vsub.s32 %v427, %v429
    %v431 = vrot.slane %v417, %v430
    %434 = vst.msk [vmem:[#allocation8 + $0x3] sm:$0x1] %vm148, %v424
    %435 = vst.msk [vmem:[#allocation8 + $0xb] sm:$0x1] %vm148, %v431
    %s436 = scalar_lea.vmem [#allocation2], 4
    %v437 = vld [vmem:[%s436] sm:$0x1]
    %v438 = vld [vmem:[#allocation5] sm:$0xf]
    %v439 = vld [vmem:[#allocation5 + $0x4] sm:$0xf]
    %v440 = vld [vmem:[#allocation5 + $0x8] sm:$0xf]
    %v441 = vld [vmem:[#allocation5 + $0xc] sm:$0xf]
    %v442 = vld [vmem:[#allocation7] sm:$0x1]
    %v444 = vlaneseq
    %v445 = vshrl.u32 %v444, 7
    %v446 = vsub.s32 0, %v445
    %v447 = vrot.slane %v442, %v446
    %v453 = vunpack.c.l.b16 %v438
    %v454 = vunpack.c.l.b16 %v439
    %v455 = vunpack.c.l.b16 %v440
    %v456 = vunpack.c.l.b16 %v441
    %v457 = vpack.c.b16 %v454, %v453
    %v458 = vpack.c.b16 %v456, %v455
    %v462 = vsel %vm79, %v437, 0
    %464 = vmatprep.subr.bf16.mxu0 0
    %465 = vmatpush1.bf16.msra.mxu0 %v457
    %466 = vmatprep.subr.bf16.mxu0 0
    %467 = vmatpush1.bf16.msra.mxu0 %v458
    %468 = vmatprep.subr.bf16.mxu0 0
    %469 = vmatpush1.bf16.msra.mxu0 0
    %470 = vmatprep.subr.bf16.mxu0 0
    %471 = vmatpush1.bf16.msra.mxu0 0
    %472 = vmatprep.subr.bf16.mxu0 0
    %473 = vmatpush1.bf16.msra.mxu0 0
    %474 = vmatprep.subr.bf16.mxu0 0
    %475 = vmatpush1.bf16.msra.mxu0 0
    %476 = vmatprep.subr.bf16.mxu0 0
    %477 = vmatpush1.bf16.msra.mxu0 0
    %478 = vmatprep.subr.bf16.mxu0 0
    %479 = vmatpush1.bf16.msra.mxu0 0
    %480 = vmatprep.subr.bf16.mxu0 0
    %481 = vmatpush1.bf16.msra.mxu0 0
    %482 = vmatprep.subr.bf16.mxu0 0
    %483 = vmatpush1.bf16.msra.mxu0 0
    %484 = vmatprep.subr.bf16.mxu0 0
    %485 = vmatpush1.bf16.msra.mxu0 0
    %486 = vmatprep.subr.bf16.mxu0 0
    %487 = vmatpush1.bf16.msra.mxu0 0
    %488 = vmatprep.subr.bf16.mxu0 0
    %489 = vmatpush1.bf16.msra.mxu0 0
    %490 = vmatprep.subr.bf16.mxu0 0
    %491 = vmatpush1.bf16.msra.mxu0 0
    %492 = vmatprep.subr.bf16.mxu0 0
    %493 = vmatpush1.bf16.msra.mxu0 0
    %494 = vmatprep.subr.bf16.mxu0 0
    %495 = vmatpush1.bf16.msra.mxu0 0
    %496 = vmatprep.mubr.bf16.mxu0 0
    %497 = vmatmul.mubr.bf16.gmra.mrb[0].mxu0 %v462
    %v498 = vpop.f32.mrb[0].mxu0
    %v499 = vadd.f32 %v447, %v498
    %v500 = vpop.f32.mrb[0].mxu0
    %v501 = vpop.f32.mrb[0].mxu0
    %v502 = vpop.f32.mrb[0].mxu0
    %503 = vdwg.mxu0
    %v506 = vunpack.c.l.s4 1966171168
    %v507 = vunpack.c.0.s8 %v506
    %v508 = vlaneseq
    %v509 = vshrl.u32 %v508, 7
    %v510 = vsub.s32 %v507, %v509
    %v511 = vrot.slane %v499, %v510
    %v512 = vcombine.high %v511, %v511
    %v514 = vunpack.c.l.s4 1966171168
    %v515 = vunpack.c.0.s8 %v514
    %v516 = vlaneseq
    %v517 = vshrl.u32 %v516, 7
    %v518 = vsub.s32 %v515, %v517
    %v519 = vrot.slane %v511, %v518
    %v521 = vunpack.c.l.s4 1966171168
    %v522 = vunpack.c.0.s8 %v521
    %v523 = vlaneseq
    %v524 = vshrl.u32 %v523, 7
    %v525 = vsub.s32 %v522, %v524
    %v526 = vrot.slane %v512, %v525
    %529 = vst.msk [vmem:[#allocation8 + $0x4] sm:$0x1] %vm148, %v519
    %530 = vst.msk [vmem:[#allocation8 + $0xc] sm:$0x1] %vm148, %v526
    %s531 = scalar_lea.vmem [#allocation2], 5
    %v532 = vld [vmem:[%s531] sm:$0x1]
    %v533 = vld [vmem:[#allocation5] sm:$0xf]
    %v534 = vld [vmem:[#allocation5 + $0x4] sm:$0xf]
    %v535 = vld [vmem:[#allocation5 + $0x8] sm:$0xf]
    %v536 = vld [vmem:[#allocation5 + $0xc] sm:$0xf]
    %v537 = vld [vmem:[#allocation7] sm:$0x1]
    %v539 = vlaneseq
    %v540 = vshrl.u32 %v539, 7
    %v541 = vsub.s32 0, %v540
    %v542 = vrot.slane %v537, %v541
    %v548 = vunpack.c.l.b16 %v533
    %v549 = vunpack.c.l.b16 %v534
    %v550 = vunpack.c.l.b16 %v535
    %v551 = vunpack.c.l.b16 %v536
    %v552 = vpack.c.b16 %v549, %v548
    %v553 = vpack.c.b16 %v551, %v550
    %v557 = vsel %vm79, %v532, 0
    %559 = vmatprep.subr.bf16.mxu0 0
    %560 = vmatpush1.bf16.msra.mxu0 %v552
    %561 = vmatprep.subr.bf16.mxu0 0
    %562 = vmatpush1.bf16.msra.mxu0 %v553
    %563 = vmatprep.subr.bf16.mxu0 0
    %564 = vmatpush1.bf16.msra.mxu0 0
    %565 = vmatprep.subr.bf16.mxu0 0
    %566 = vmatpush1.bf16.msra.mxu0 0
    %567 = vmatprep.subr.bf16.mxu0 0
    %568 = vmatpush1.bf16.msra.mxu0 0
    %569 = vmatprep.subr.bf16.mxu0 0
    %570 = vmatpush1.bf16.msra.mxu0 0
    %571 = vmatprep.subr.bf16.mxu0 0
    %572 = vmatpush1.bf16.msra.mxu0 0
    %573 = vmatprep.subr.bf16.mxu0 0
    %574 = vmatpush1.bf16.msra.mxu0 0
    %575 = vmatprep.subr.bf16.mxu0 0
    %576 = vmatpush1.bf16.msra.mxu0 0
    %577 = vmatprep.subr.bf16.mxu0 0
    %578 = vmatpush1.bf16.msra.mxu0 0
    %579 = vmatprep.subr.bf16.mxu0 0
    %580 = vmatpush1.bf16.msra.mxu0 0
    %581 = vmatprep.subr.bf16.mxu0 0
    %582 = vmatpush1.bf16.msra.mxu0 0
    %583 = vmatprep.subr.bf16.mxu0 0
    %584 = vmatpush1.bf16.msra.mxu0 0
    %585 = vmatprep.subr.bf16.mxu0 0
    %586 = vmatpush1.bf16.msra.mxu0 0
    %587 = vmatprep.subr.bf16.mxu0 0
    %588 = vmatpush1.bf16.msra.mxu0 0
    %589 = vmatprep.subr.bf16.mxu0 0
    %590 = vmatpush1.bf16.msra.mxu0 0
    %591 = vmatprep.mubr.bf16.mxu0 0
    %592 = vmatmul.mubr.bf16.gmra.mrb[0].mxu0 %v557
    %v593 = vpop.f32.mrb[0].mxu0
    %v594 = vadd.f32 %v542, %v593
    %v595 = vpop.f32.mrb[0].mxu0
    %v596 = vpop.f32.mrb[0].mxu0
    %v597 = vpop.f32.mrb[0].mxu0
    %598 = vdwg.mxu0
    %v601 = vunpack.c.l.s4 1966171168
    %v602 = vunpack.c.0.s8 %v601
    %v603 = vlaneseq
    %v604 = vshrl.u32 %v603, 7
    %v605 = vsub.s32 %v602, %v604
    %v606 = vrot.slane %v594, %v605
    %v607 = vcombine.high %v606, %v606
    %v609 = vunpack.c.l.s4 1966171168
    %v610 = vunpack.c.0.s8 %v609
    %v611 = vlaneseq
    %v612 = vshrl.u32 %v611, 7
    %v613 = vsub.s32 %v610, %v612
    %v614 = vrot.slane %v606, %v613
    %v616 = vunpack.c.l.s4 1966171168
    %v617 = vunpack.c.0.s8 %v616
    %v618 = vlaneseq
    %v619 = vshrl.u32 %v618, 7
    %v620 = vsub.s32 %v617, %v619
    %v621 = vrot.slane %v607, %v620
    %624 = vst.msk [vmem:[#allocation8 + $0x5] sm:$0x1] %vm148, %v614
    %625 = vst.msk [vmem:[#allocation8 + $0xd] sm:$0x1] %vm148, %v621
    %s626 = scalar_lea.vmem [#allocation2], 6
    %v627 = vld [vmem:[%s626] sm:$0x1]
    %v628 = vld [vmem:[#allocation5] sm:$0xf]
    %v629 = vld [vmem:[#allocation5 + $0x4] sm:$0xf]
    %v630 = vld [vmem:[#allocation5 + $0x8] sm:$0xf]
    %v631 = vld [vmem:[#allocation5 + $0xc] sm:$0xf]
    %v632 = vld [vmem:[#allocation7] sm:$0x1]
    %v634 = vlaneseq
    %v635 = vshrl.u32 %v634, 7
    %v636 = vsub.s32 0, %v635
    %v637 = vrot.slane %v632, %v636
    %v643 = vunpack.c.l.b16 %v628
    %v644 = vunpack.c.l.b16 %v629
    %v645 = vunpack.c.l.b16 %v630
    %v646 = vunpack.c.l.b16 %v631
    %v647 = vpack.c.b16 %v644, %v643
    %v648 = vpack.c.b16 %v646, %v645
    %v652 = vsel %vm79, %v627, 0
    %654 = vmatprep.subr.bf16.mxu0 0
    %655 = vmatpush1.bf16.msra.mxu0 %v647
    %656 = vmatprep.subr.bf16.mxu0 0
    %657 = vmatpush1.bf16.msra.mxu0 %v648
    %658 = vmatprep.subr.bf16.mxu0 0
    %659 = vmatpush1.bf16.msra.mxu0 0
    %660 = vmatprep.subr.bf16.mxu0 0
    %661 = vmatpush1.bf16.msra.mxu0 0
    %662 = vmatprep.subr.bf16.mxu0 0
    %663 = vmatpush1.bf16.msra.mxu0 0
    %664 = vmatprep.subr.bf16.mxu0 0
    %665 = vmatpush1.bf16.msra.mxu0 0
    %666 = vmatprep.subr.bf16.mxu0 0
    %667 = vmatpush1.bf16.msra.mxu0 0
    %668 = vmatprep.subr.bf16.mxu0 0
    %669 = vmatpush1.bf16.msra.mxu0 0
    %670 = vmatprep.subr.bf16.mxu0 0
    %671 = vmatpush1.bf16.msra.mxu0 0
    %672 = vmatprep.subr.bf16.mxu0 0
    %673 = vmatpush1.bf16.msra.mxu0 0
    %674 = vmatprep.subr.bf16.mxu0 0
    %675 = vmatpush1.bf16.msra.mxu0 0
    %676 = vmatprep.subr.bf16.mxu0 0
    %677 = vmatpush1.bf16.msra.mxu0 0
    %678 = vmatprep.subr.bf16.mxu0 0
    %679 = vmatpush1.bf16.msra.mxu0 0
    %680 = vmatprep.subr.bf16.mxu0 0
    %681 = vmatpush1.bf16.msra.mxu0 0
    %682 = vmatprep.subr.bf16.mxu0 0
    %683 = vmatpush1.bf16.msra.mxu0 0
    %684 = vmatprep.subr.bf16.mxu0 0
    %685 = vmatpush1.bf16.msra.mxu0 0
    %686 = vmatprep.mubr.bf16.mxu0 0
    %687 = vmatmul.mubr.bf16.gmra.mrb[0].mxu0 %v652
    %v688 = vpop.f32.mrb[0].mxu0
    %v689 = vadd.f32 %v637, %v688
    %v690 = vpop.f32.mrb[0].mxu0
    %v691 = vpop.f32.mrb[0].mxu0
    %v692 = vpop.f32.mrb[0].mxu0
    %693 = vdwg.mxu0
    %v696 = vunpack.c.l.s4 1966171168
    %v697 = vunpack.c.0.s8 %v696
    %v698 = vlaneseq
    %v699 = vshrl.u32 %v698, 7
    %v700 = vsub.s32 %v697, %v699
    %v701 = vrot.slane %v689, %v700
    %v702 = vcombine.high %v701, %v701
    %v704 = vunpack.c.l.s4 1966171168
    %v705 = vunpack.c.0.s8 %v704
    %v706 = vlaneseq
    %v707 = vshrl.u32 %v706, 7
    %v708 = vsub.s32 %v705, %v707
    %v709 = vrot.slane %v701, %v708
    %v711 = vunpack.c.l.s4 1966171168
    %v712 = vunpack.c.0.s8 %v711
    %v713 = vlaneseq
    %v714 = vshrl.u32 %v713, 7
    %v715 = vsub.s32 %v712, %v714
    %v716 = vrot.slane %v702, %v715
    %719 = vst.msk [vmem:[#allocation8 + $0x6] sm:$0x1] %vm148, %v709
    %720 = vst.msk [vmem:[#allocation8 + $0xe] sm:$0x1] %vm148, %v716
    %s721 = scalar_lea.vmem [#allocation2], 7
    %v722 = vld [vmem:[%s721] sm:$0x1]
    %v723 = vld [vmem:[#allocation5] sm:$0xf]
    %v724 = vld [vmem:[#allocation5 + $0x4] sm:$0xf]
    %v725 = vld [vmem:[#allocation5 + $0x8] sm:$0xf]
    %v726 = vld [vmem:[#allocation5 + $0xc] sm:$0xf]
    %v727 = vld [vmem:[#allocation7] sm:$0x1]
    %v729 = vlaneseq
    %v730 = vshrl.u32 %v729, 7
    %v731 = vsub.s32 0, %v730
    %v732 = vrot.slane %v727, %v731
    %v738 = vunpack.c.l.b16 %v723
    %v739 = vunpack.c.l.b16 %v724
    %v740 = vunpack.c.l.b16 %v725
    %v741 = vunpack.c.l.b16 %v726
    %v742 = vpack.c.b16 %v739, %v738
    %v743 = vpack.c.b16 %v741, %v740
    %v747 = vsel %vm79, %v722, 0
    %749 = vmatprep.subr.bf16.mxu0 0
    %750 = vmatpush1.bf16.msra.mxu0 %v742
    %751 = vmatprep.subr.bf16.mxu0 0
    %752 = vmatpush1.bf16.msra.mxu0 %v743
    %753 = vmatprep.subr.bf16.mxu0 0
    %754 = vmatpush1.bf16.msra.mxu0 0
    %755 = vmatprep.subr.bf16.mxu0 0
    %756 = vmatpush1.bf16.msra.mxu0 0
    %757 = vmatprep.subr.bf16.mxu0 0
    %758 = vmatpush1.bf16.msra.mxu0 0
    %759 = vmatprep.subr.bf16.mxu0 0
    %760 = vmatpush1.bf16.msra.mxu0 0
    %761 = vmatprep.subr.bf16.mxu0 0
    %762 = vmatpush1.bf16.msra.mxu0 0
    %763 = vmatprep.subr.bf16.mxu0 0
    %764 = vmatpush1.bf16.msra.mxu0 0
    %765 = vmatprep.subr.bf16.mxu0 0
    %766 = vmatpush1.bf16.msra.mxu0 0
    %767 = vmatprep.subr.bf16.mxu0 0
    %768 = vmatpush1.bf16.msra.mxu0 0
    %769 = vmatprep.subr.bf16.mxu0 0
    %770 = vmatpush1.bf16.msra.mxu0 0
    %771 = vmatprep.subr.bf16.mxu0 0
    %772 = vmatpush1.bf16.msra.mxu0 0
    %773 = vmatprep.subr.bf16.mxu0 0
    %774 = vmatpush1.bf16.msra.mxu0 0
    %775 = vmatprep.subr.bf16.mxu0 0
    %776 = vmatpush1.bf16.msra.mxu0 0
    %777 = vmatprep.subr.bf16.mxu0 0
    %778 = vmatpush1.bf16.msra.mxu0 0
    %779 = vmatprep.subr.bf16.mxu0 0
    %780 = vmatpush1.bf16.msra.mxu0 0
    %781 = vmatprep.mubr.bf16.mxu0 0
    %782 = vmatmul.mubr.bf16.gmra.mrb[0].mxu0 %v747
    %v783 = vpop.f32.mrb[0].mxu0
    %v784 = vadd.f32 %v732, %v783
    %v785 = vpop.f32.mrb[0].mxu0
    %v786 = vpop.f32.mrb[0].mxu0
    %v787 = vpop.f32.mrb[0].mxu0
    %788 = vdwg.mxu0
    %v791 = vunpack.c.l.s4 1966171168
    %v792 = vunpack.c.0.s8 %v791
    %v793 = vlaneseq
    %v794 = vshrl.u32 %v793, 7
    %v795 = vsub.s32 %v792, %v794
    %v796 = vrot.slane %v784, %v795
    %v797 = vcombine.high %v796, %v796
    %v799 = vunpack.c.l.s4 1966171168
    %v800 = vunpack.c.0.s8 %v799
    %v801 = vlaneseq
    %v802 = vshrl.u32 %v801, 7
    %v803 = vsub.s32 %v800, %v802
    %v804 = vrot.slane %v796, %v803
    %v806 = vunpack.c.l.s4 1966171168
    %v807 = vunpack.c.0.s8 %v806
    %v808 = vlaneseq
    %v809 = vshrl.u32 %v808, 7
    %v810 = vsub.s32 %v807, %v809
    %v811 = vrot.slane %v797, %v810
    %814 = vst.msk [vmem:[#allocation8 + $0x7] sm:$0x1] %vm148, %v804
    %815 = vst.msk [vmem:[#allocation8 + $0xf] sm:$0x1] %vm148, %v811
    // Predicated region
    $region26: #{rnn_language_model_forward.5} parent=1 // pred_check
      _
    $region27: #{rnn_language_model_forward.5} parent=1 // pred_check_branch
      %817 = sbr.rel (0) target = $region29
    $region28: #{rnn_language_model_forward.5} parent=1 // pred_region
      %s819 = ssub.s32 256, 256
      %820 = vsyncadd [#allocation4], %s819
      %s821 = sshll.u32 [#allocation8], 4
      %s822 = int_to_ptr.vmem [resolvable:$true] %s821
      %827 = dma.vmem_to_hbm [thread:$0]  %s822, 256, %s3, [#allocation4], 128, 128, 8
    $region29: #{rnn_language_model_forward.5} parent=1 // pred_fallthru
      _
    // Predicated region
    $region30: #{rnn_language_model_forward.5} parent=1 // pred_check
      _
    $region31: #{rnn_language_model_forward.5} parent=1 // pred_check_branch
      %829 = sbr.rel (0) target = $region33
    $region32: #{rnn_language_model_forward.5} parent=1 // pred_region
      %830 = dma.done [#allocation4], 256
    $region33: #{rnn_language_model_forward.5} parent=1 // pred_fallthru
      _
    %831 = vsyncpa [#allocation3], 1
    %832 = vsyncpa [#allocation6], 1
    %833 = vsyncpa [#allocation4], 1

</llo_original>
